<compile_context>
chip_gen: v7x
topology: tpu7x:2x2x1
jax: 0.10.0
libtpu: 0.0.40
codegen_flags: <defaults>
</compile_context>

<pallas_src>
import numpy as np
import jax
import jax.numpy as jnp
from jax.experimental import pallas as pl
from jax.experimental.pallas import tpu as pltpu


# ----------------------------------------------------------------------------
# Pallas kernel
# ----------------------------------------------------------------------------
def patient_repr_kernel(diag_codes_ref, pro_codes_ref,     # SMEM int32 (T,Ld),(T,Lp)
                        emb_d_ref, emb_p_ref,              # VMEM (Vd+1,H),(Vp+1,H); last row zero
                        wi_d_ref, wi_p_ref,                # (H, 3*GP) fused input W, diag/pro halves
                        whh_ref,                           # (GP, 3*GP) fused hidden W
                        b_gi_ref, b_hn_ref,                # (1, 3*GP), (1, GP)
                        wq_ref, bq_ref,                    # (GP, H), (1, H)
                        out_ref,                           # (1, H)
                        xd_ref, xp_ref, gi_ref):           # scratch (T,H),(T,H),(T,3*GP)
    T, Ld = diag_codes_ref.shape
    _, Lp = pro_codes_ref.shape
    H = emb_d_ref.shape[1]
    GP = whh_ref.shape[0]            # per-gate lane-padded width (multiple of 128, >= 2H)

    # ---- stage 1: embedding gather + sum, fully unrolled (T, Ld, Lp static). ----
    # Codes were pre-cleaned host-side (invalid -> index of the appended zero row),
    # so the hot path is pure gather + accumulate: no clamp, no mask, no select.
    def gather_sum(codes_ref, emb_ref, t, num_codes):
        acc = emb_ref[pl.ds(codes_ref[t, 0], 1), :]          # (1, H) dynamic row gather
        for l in range(1, num_codes):
            acc = acc + emb_ref[pl.ds(codes_ref[t, l], 1), :]
        return acc

    for t in range(T):
        xd_ref[pl.ds(t, 1), :] = gather_sum(diag_codes_ref, emb_d_ref, t, Ld)
        xp_ref[pl.ds(t, 1), :] = gather_sum(pro_codes_ref, emb_p_ref, t, Lp)

    # ---- stage 2: all-timestep input projections, one fused [r|z|n] buffer. ----
    # Splitting the fused weight by input half avoids the per-step lane concat of
    # [x_diag | x_pro]; r/z biases already include bhh (folded on the host).
    gi_ref[...] = (jnp.dot(xd_ref[...], wi_d_ref[...], preferred_element_type=jnp.float32)
                   + jnp.dot(xp_ref[...], wi_p_ref[...], preferred_element_type=jnp.float32)
                   + b_gi_ref[...])

    # ---- stage 3: fused two-GRU recurrence, fully unrolled over static T. ----
    # Hidden state h = [h_diag | h_pro | zero padding] (1, GP).  One MXU launch
    # per step; gate blocks are 128-lane aligned so r/z/n slices are vreg views;
    # a single sigmoid push covers both r and z (adjacent gate blocks).
    whh = whh_ref[...]
    b_hn = b_hn_ref[...]
    h = jnp.zeros((1, GP), jnp.float32)
    for t in range(T):
        gi_t = gi_ref[pl.ds(t, 1), :]                                 # (1, 3*GP) static row
        gh = jnp.dot(h, whh, preferred_element_type=jnp.float32)      # (1, 3*GP)
        rz = jax.nn.sigmoid(gi_t[:, :2 * GP] + gh[:, :2 * GP])
        r = rz[:, :GP]
        z = rz[:, GP:]
        n = jnp.tanh(gi_t[:, 2 * GP:] + r * (gh[:, 2 * GP:] + b_hn))
        h = n + z * (h - n)                                           # == (1-z)*n + z*h

    # ---- stage 4: ReLU + Linear on the last patient representation. ----
    # Padding lanes of h are exactly zero and wq's padding rows are zero.
    out_ref[...] = (jnp.dot(jnp.maximum(h, 0.0), wq_ref[...],
                            preferred_element_type=jnp.float32) + bq_ref[...])


def patient_represent(diag_codes, pro_codes, p):
    """diag_codes: (T, Ld) int32; pro_codes: (T, Lp) int32 -> query (1, H) f32."""
    H = p["emb_d"].shape[1]
    Vd = p["emb_d"].shape[0] - 1          # last row of each table is the zero row
    Vp = p["emb_p"].shape[0] - 1
    T = diag_codes.shape[0]
    GP = p["whh"].shape[0]

    # Pre-clean codes: out-of-range indices hit the zero row -> contribute nothing.
    diag_codes = jnp.where((diag_codes >= 0) & (diag_codes < Vd), diag_codes, Vd).astype(jnp.int32)
    pro_codes = jnp.where((pro_codes >= 0) & (pro_codes < Vp), pro_codes, Vp).astype(jnp.int32)

    smem = pl.BlockSpec(memory_space=pltpu.MemorySpace.SMEM)
    vmem = pl.BlockSpec(memory_space=pltpu.MemorySpace.VMEM)
    return pl.pallas_call(
        patient_repr_kernel,
        out_shape=jax.ShapeDtypeStruct((1, H), jnp.float32),
        in_specs=[smem, smem] + [vmem] * 9,
        out_specs=vmem,
        scratch_shapes=[pltpu.VMEM((T, H), jnp.float32),
                        pltpu.VMEM((T, H), jnp.float32),
                        pltpu.VMEM((T, 3 * GP), jnp.float32)],
        compiler_params=pltpu.CompilerParams(vmem_limit_bytes=32 * 1024 * 1024),
    )(diag_codes, pro_codes,
      p["emb_d"], p["emb_p"],
      p["wi_d"], p["wi_p"], p["whh"],
      p["b_gi"], p["b_hn"],
      p["wq_t"], p["bq"])


# ----------------------------------------------------------------------------
# Parameter init (raw, PyTorch-layout) and host-side fusion for the kernel
# ----------------------------------------------------------------------------
def init_raw_params(key, diag_voc, pro_voc, H):
    ks = jax.random.split(key, 12)
    u = lambda k, shape, r: jax.random.uniform(k, shape, jnp.float32, -r, r)
    s = 1.0 / np.sqrt(H)
    sq = 1.0 / np.sqrt(2 * H)
    return {
        # embeddings: uniform(-0.1, 0.1) as in init_weights()
        "emb_d": u(ks[0], (diag_voc, H), 0.1),
        "emb_p": u(ks[1], (pro_voc, H), 0.1),
        # GRU 0 (diag): weight_ih/hh (3H, H) rows ordered [r; z; n], biases (3H,)
        "wih_d": u(ks[2], (3 * H, H), s), "whh_d": u(ks[3], (3 * H, H), s),
        "bih_d": u(ks[4], (3 * H,), s),   "bhh_d": u(ks[5], (3 * H,), s),
        # GRU 1 (pro)
        "wih_p": u(ks[6], (3 * H, H), s), "whh_p": u(ks[7], (3 * H, H), s),
        "bih_p": u(ks[8], (3 * H,), s),   "bhh_p": u(ks[9], (3 * H,), s),
        # Linear(2H -> H): weight (H, 2H), bias (H,)
        "wq": u(ks[10], (H, 2 * H), sq),
        "bq": u(ks[11], (H,), sq),
    }


def prepare_fused_params(raw):
    """Host-side fusion: padded [r|z|n] weights, folded biases, zero-row tables."""
    H = raw["emb_d"].shape[1]
    H2 = 2 * H
    GP = ((H2 + 127) // 128) * 128       # per-gate block width, 128-lane aligned

    def split_gates(w):                   # (3H,H) -> (r,z,n), each transposed to (in,out)
        w = np.asarray(w)
        return w[0:H].T, w[H:2 * H].T, w[2 * H:3 * H].T

    wd_i = split_gates(raw["wih_d"]); wp_i = split_gates(raw["wih_p"])
    wd_h = split_gates(raw["whh_d"]); wp_h = split_gates(raw["whh_p"])
    bih_d = np.asarray(raw["bih_d"]); bhh_d = np.asarray(raw["bhh_d"])
    bih_p = np.asarray(raw["bih_p"]); bhh_p = np.asarray(raw["bhh_p"])

    # Fused input projections, split by input half (diag rows / pro rows).
    wi_d = np.zeros((H, 3 * GP), np.float32)
    wi_p = np.zeros((H, 3 * GP), np.float32)
    # Fused hidden projection over the concatenated padded state [h_d | h_p | 0].
    # Padding rows/cols are zero, so padding lanes of h never leak into real lanes.
    whh = np.zeros((GP, 3 * GP), np.float32)
    for g in range(3):
        wi_d[:, g * GP: g * GP + H] = wd_i[g]
        wi_p[:, g * GP + H: g * GP + H2] = wp_i[g]
        whh[0:H, g * GP: g * GP + H] = wd_h[g]
        whh[H:H2, g * GP + H: g * GP + H2] = wp_h[g]

    # Gate biases: r/z folded (bih + bhh); n keeps bih here and bhh separately (× r).
    b_gi = np.zeros((1, 3 * GP), np.float32)
    for g, sl in enumerate((slice(0, H), slice(H, 2 * H), slice(2 * H, 3 * H))):
        bd = bih_d[sl] + (bhh_d[sl] if g < 2 else 0.0)
        bp = bih_p[sl] + (bhh_p[sl] if g < 2 else 0.0)
        b_gi[0, g * GP: g * GP + H] = bd
        b_gi[0, g * GP + H: g * GP + H2] = bp
    b_hn = np.zeros((1, GP), np.float32)
    b_hn[0, 0:H] = bhh_d[2 * H:]
    b_hn[0, H:H2] = bhh_p[2 * H:]

    # Output projection padded with zero rows for the hidden-state padding lanes.
    wq_t = np.zeros((GP, H), np.float32)
    wq_t[0:H2, :] = np.asarray(raw["wq"]).T

    zrow = lambda e: jnp.concatenate([e, jnp.zeros((1, H), e.dtype)], axis=0)
    return {
        "emb_d": zrow(raw["emb_d"]), "emb_p": zrow(raw["emb_p"]),
        "wi_d": jnp.asarray(wi_d), "wi_p": jnp.asarray(wi_p), "whh": jnp.asarray(whh),
        "b_gi": jnp.asarray(b_gi), "b_hn": jnp.asarray(b_hn),
        "wq_t": jnp.asarray(wq_t), "bq": jnp.asarray(raw["bq"]).reshape(1, H),
    }


# ----------------------------------------------------------------------------
# Pure-JAX reference mirroring the PyTorch forward (for correctness check)
# ----------------------------------------------------------------------------
def reference(diag_codes, pro_codes, raw):
    H = raw["emb_d"].shape[1]
    x_d = raw["emb_d"][diag_codes].sum(axis=1)     # (T, H)
    x_p = raw["emb_p"][pro_codes].sum(axis=1)      # (T, H)

    def run_gru(x, wih, whh, bih, bhh):
        h = jnp.zeros((H,), jnp.float32)
        hs = []
        for t in range(x.shape[0]):
            gi = wih @ x[t] + bih
            gh = whh @ h + bhh
            r = jax.nn.sigmoid(gi[:H] + gh[:H])
            z = jax.nn.sigmoid(gi[H:2 * H] + gh[H:2 * H])
            n = jnp.tanh(gi[2 * H:] + r * gh[2 * H:])
            h = (1.0 - z) * n + z * h
            hs.append(h)
        return jnp.stack(hs)                        # (T, H)

    enc_d = run_gru(x_d, raw["wih_d"], raw["whh_d"], raw["bih_d"], raw["bhh_d"])
    enc_p = run_gru(x_p, raw["wih_p"], raw["whh_p"], raw["bih_p"], raw["bhh_p"])
    rep = jnp.concatenate([enc_d, enc_p], axis=-1)  # (T, 2H)
    q = jnp.maximum(rep, 0.0) @ raw["wq"].T + raw["bq"]
    return q[-1:, :]                                # (1, H)


if __name__ == "__main__":
    # Small synthetic problem: 5 admissions, 6 diag codes & 4 procedure codes each.
    diag_voc, pro_voc, hidden_dim = 64, 48, 32
    T, Ld, Lp = 5, 6, 4

    key = jax.random.PRNGKey(0)
    k_codes_d, k_codes_p, k_params = jax.random.split(key, 3)
    diag_codes = jax.random.randint(k_codes_d, (T, Ld), 0, diag_voc, dtype=jnp.int32)
    pro_codes = jax.random.randint(k_codes_p, (T, Lp), 0, pro_voc, dtype=jnp.int32)

    raw = init_raw_params(k_params, diag_voc, pro_voc, hidden_dim)
    fused = prepare_fused_params(raw)

    query = patient_represent(diag_codes, pro_codes, fused)
    query = jax.block_until_ready(query)

    ref = reference(diag_codes, pro_codes, raw)
    assert query.shape == (1, hidden_dim)
    np.testing.assert_allclose(np.asarray(query), np.asarray(ref), rtol=1e-4, atol=1e-5)

    # TODO(synk): Dropout(p=0.5) is a no-op in eval mode; training-mode masks would
    # need pltpu.prng_seed/prng_random_bits.
    # TODO(synk): for multi-patient throughput, batch the recurrence (h as (B, GP))
    # and add a "parallel" grid axis over patients (uses both v7x TensorCores); for
    # production vocab sizes, store embedding tables in bf16 (or HBM with manual
    # gather DMA on v7x's 64 MiB VMEM) while keeping them VMEM-resident on v5e.
    print("KERNEL_OK")
</pallas_src>

<mosaic_0001>
module attributes {stable_mosaic.version = 11 : i64} {
  func.func @patient_repr_kernel(%arg0: memref<5x6xi32, #tpu.memory_space<smem>>, %arg1: memref<5x4xi32, #tpu.memory_space<smem>>, %arg2: memref<65x32xf32, #tpu.memory_space<vmem>>, %arg3: memref<49x32xf32, #tpu.memory_space<vmem>>, %arg4: memref<32x384xf32, #tpu.memory_space<vmem>>, %arg5: memref<32x384xf32, #tpu.memory_space<vmem>>, %arg6: memref<128x384xf32, #tpu.memory_space<vmem>>, %arg7: memref<1x384xf32, #tpu.memory_space<vmem>>, %arg8: memref<1x128xf32, #tpu.memory_space<vmem>>, %arg9: memref<128x32xf32, #tpu.memory_space<vmem>>, %arg10: memref<1x32xf32, #tpu.memory_space<vmem>>, %arg11: memref<1x32xf32, #tpu.memory_space<vmem>>, %arg12: memref<5x32xf32, #tpu.memory_space<vmem>>, %arg13: memref<5x32xf32, #tpu.memory_space<vmem>>, %arg14: memref<5x384xf32, #tpu.memory_space<vmem>>) attributes {dimension_semantics = [], scalar_prefetch = 0 : i64, scratch_operands = 3 : i64, tpu.core_type = #tpu.core_type<tc>} {
    %c0 = arith.constant 0 : index
    %c0_0 = arith.constant 0 : index
    %0 = memref.load %arg0[%c0, %c0_0] : memref<5x6xi32, #tpu.memory_space<smem>>
    %1 = arith.index_cast %0 : i32 to index
    %c0_1 = arith.constant 0 : index
    %2 = vector.load %arg2[%1, %c0_1] : memref<65x32xf32, #tpu.memory_space<vmem>>, vector<1x32xf32>
    %c0_2 = arith.constant 0 : index
    %c1 = arith.constant 1 : index
    %3 = memref.load %arg0[%c0_2, %c1] : memref<5x6xi32, #tpu.memory_space<smem>>
    %4 = arith.index_cast %3 : i32 to index
    %c0_3 = arith.constant 0 : index
    %5 = vector.load %arg2[%4, %c0_3] : memref<65x32xf32, #tpu.memory_space<vmem>>, vector<1x32xf32>
    %6 = arith.addf %2, %5 : vector<1x32xf32>
    %c0_4 = arith.constant 0 : index
    %c2 = arith.constant 2 : index
    %7 = memref.load %arg0[%c0_4, %c2] : memref<5x6xi32, #tpu.memory_space<smem>>
    %8 = arith.index_cast %7 : i32 to index
    %c0_5 = arith.constant 0 : index
    %9 = vector.load %arg2[%8, %c0_5] : memref<65x32xf32, #tpu.memory_space<vmem>>, vector<1x32xf32>
    %10 = arith.addf %6, %9 : vector<1x32xf32>
    %c0_6 = arith.constant 0 : index
    %c3 = arith.constant 3 : index
    %11 = memref.load %arg0[%c0_6, %c3] : memref<5x6xi32, #tpu.memory_space<smem>>
    %12 = arith.index_cast %11 : i32 to index
    %c0_7 = arith.constant 0 : index
    %13 = vector.load %arg2[%12, %c0_7] : memref<65x32xf32, #tpu.memory_space<vmem>>, vector<1x32xf32>
    %14 = arith.addf %10, %13 : vector<1x32xf32>
    %c0_8 = arith.constant 0 : index
    %c4 = arith.constant 4 : index
    %15 = memref.load %arg0[%c0_8, %c4] : memref<5x6xi32, #tpu.memory_space<smem>>
    %16 = arith.index_cast %15 : i32 to index
    %c0_9 = arith.constant 0 : index
    %17 = vector.load %arg2[%16, %c0_9] : memref<65x32xf32, #tpu.memory_space<vmem>>, vector<1x32xf32>
    %18 = arith.addf %14, %17 : vector<1x32xf32>
    %c0_10 = arith.constant 0 : index
    %c5 = arith.constant 5 : index
    %19 = memref.load %arg0[%c0_10, %c5] : memref<5x6xi32, #tpu.memory_space<smem>>
    %20 = arith.index_cast %19 : i32 to index
    %c0_11 = arith.constant 0 : index
    %21 = vector.load %arg2[%20, %c0_11] : memref<65x32xf32, #tpu.memory_space<vmem>>, vector<1x32xf32>
    %22 = arith.addf %18, %21 : vector<1x32xf32>
    %c0_12 = arith.constant 0 : index
    %c0_13 = arith.constant 0 : index
    %23 = vector.load %arg12[%c0_12, %c0_13] : memref<5x32xf32, #tpu.memory_space<vmem>>, vector<1x32xf32>
    tpu.vector_store %arg12[%c0_12, %c0_13], %22 {strides = array<i32>} : memref<5x32xf32, #tpu.memory_space<vmem>>, vector<1x32xf32>,
    %c0_14 = arith.constant 0 : index
    %c0_15 = arith.constant 0 : index
    %24 = memref.load %arg1[%c0_14, %c0_15] : memref<5x4xi32, #tpu.memory_space<smem>>
    %25 = arith.index_cast %24 : i32 to index
    %c0_16 = arith.constant 0 : index
    %26 = vector.load %arg3[%25, %c0_16] : memref<49x32xf32, #tpu.memory_space<vmem>>, vector<1x32xf32>
    %c0_17 = arith.constant 0 : index
    %c1_18 = arith.constant 1 : index
    %27 = memref.load %arg1[%c0_17, %c1_18] : memref<5x4xi32, #tpu.memory_space<smem>>
    %28 = arith.index_cast %27 : i32 to index
    %c0_19 = arith.constant 0 : index
    %29 = vector.load %arg3[%28, %c0_19] : memref<49x32xf32, #tpu.memory_space<vmem>>, vector<1x32xf32>
    %30 = arith.addf %26, %29 : vector<1x32xf32>
    %c0_20 = arith.constant 0 : index
    %c2_21 = arith.constant 2 : index
    %31 = memref.load %arg1[%c0_20, %c2_21] : memref<5x4xi32, #tpu.memory_space<smem>>
    %32 = arith.index_cast %31 : i32 to index
    %c0_22 = arith.constant 0 : index
    %33 = vector.load %arg3[%32, %c0_22] : memref<49x32xf32, #tpu.memory_space<vmem>>, vector<1x32xf32>
    %34 = arith.addf %30, %33 : vector<1x32xf32>
    %c0_23 = arith.constant 0 : index
    %c3_24 = arith.constant 3 : index
    %35 = memref.load %arg1[%c0_23, %c3_24] : memref<5x4xi32, #tpu.memory_space<smem>>
    %36 = arith.index_cast %35 : i32 to index
    %c0_25 = arith.constant 0 : index
    %37 = vector.load %arg3[%36, %c0_25] : memref<49x32xf32, #tpu.memory_space<vmem>>, vector<1x32xf32>
    %38 = arith.addf %34, %37 : vector<1x32xf32>
    %c0_26 = arith.constant 0 : index
    %c0_27 = arith.constant 0 : index
    %39 = vector.load %arg13[%c0_26, %c0_27] : memref<5x32xf32, #tpu.memory_space<vmem>>, vector<1x32xf32>
    tpu.vector_store %arg13[%c0_26, %c0_27], %38 {strides = array<i32>} : memref<5x32xf32, #tpu.memory_space<vmem>>, vector<1x32xf32>,
    %c1_28 = arith.constant 1 : index
    %c0_29 = arith.constant 0 : index
    %40 = memref.load %arg0[%c1_28, %c0_29] : memref<5x6xi32, #tpu.memory_space<smem>>
    %41 = arith.index_cast %40 : i32 to index
    %c0_30 = arith.constant 0 : index
    %42 = vector.load %arg2[%41, %c0_30] : memref<65x32xf32, #tpu.memory_space<vmem>>, vector<1x32xf32>
    %c1_31 = arith.constant 1 : index
    %c1_32 = arith.constant 1 : index
    %43 = memref.load %arg0[%c1_31, %c1_32] : memref<5x6xi32, #tpu.memory_space<smem>>
    %44 = arith.index_cast %43 : i32 to index
    %c0_33 = arith.constant 0 : index
    %45 = vector.load %arg2[%44, %c0_33] : memref<65x32xf32, #tpu.memory_space<vmem>>, vector<1x32xf32>
    %46 = arith.addf %42, %45 : vector<1x32xf32>
    %c1_34 = arith.constant 1 : index
    %c2_35 = arith.constant 2 : index
    %47 = memref.load %arg0[%c1_34, %c2_35] : memref<5x6xi32, #tpu.memory_space<smem>>
    %48 = arith.index_cast %47 : i32 to index
    %c0_36 = arith.constant 0 : index
    %49 = vector.load %arg2[%48, %c0_36] : memref<65x32xf32, #tpu.memory_space<vmem>>, vector<1x32xf32>
    %50 = arith.addf %46, %49 : vector<1x32xf32>
    %c1_37 = arith.constant 1 : index
    %c3_38 = arith.constant 3 : index
    %51 = memref.load %arg0[%c1_37, %c3_38] : memref<5x6xi32, #tpu.memory_space<smem>>
    %52 = arith.index_cast %51 : i32 to index
    %c0_39 = arith.constant 0 : index
    %53 = vector.load %arg2[%52, %c0_39] : memref<65x32xf32, #tpu.memory_space<vmem>>, vector<1x32xf32>
    %54 = arith.addf %50, %53 : vector<1x32xf32>
    %c1_40 = arith.constant 1 : index
    %c4_41 = arith.constant 4 : index
    %55 = memref.load %arg0[%c1_40, %c4_41] : memref<5x6xi32, #tpu.memory_space<smem>>
    %56 = arith.index_cast %55 : i32 to index
    %c0_42 = arith.constant 0 : index
    %57 = vector.load %arg2[%56, %c0_42] : memref<65x32xf32, #tpu.memory_space<vmem>>, vector<1x32xf32>
    %58 = arith.addf %54, %57 : vector<1x32xf32>
    %c1_43 = arith.constant 1 : index
    %c5_44 = arith.constant 5 : index
    %59 = memref.load %arg0[%c1_43, %c5_44] : memref<5x6xi32, #tpu.memory_space<smem>>
    %60 = arith.index_cast %59 : i32 to index
    %c0_45 = arith.constant 0 : index
    %61 = vector.load %arg2[%60, %c0_45] : memref<65x32xf32, #tpu.memory_space<vmem>>, vector<1x32xf32>
    %62 = arith.addf %58, %61 : vector<1x32xf32>
    %c1_46 = arith.constant 1 : index
    %c0_47 = arith.constant 0 : index
    %63 = vector.load %arg12[%c1_46, %c0_47] : memref<5x32xf32, #tpu.memory_space<vmem>>, vector<1x32xf32>
    tpu.vector_store %arg12[%c1_46, %c0_47], %62 {strides = array<i32>} : memref<5x32xf32, #tpu.memory_space<vmem>>, vector<1x32xf32>,
    %c1_48 = arith.constant 1 : index
    %c0_49 = arith.constant 0 : index
    %64 = memref.load %arg1[%c1_48, %c0_49] : memref<5x4xi32, #tpu.memory_space<smem>>
    %65 = arith.index_cast %64 : i32 to index
    %c0_50 = arith.constant 0 : index
    %66 = vector.load %arg3[%65, %c0_50] : memref<49x32xf32, #tpu.memory_space<vmem>>, vector<1x32xf32>
    %c1_51 = arith.constant 1 : index
    %c1_52 = arith.constant 1 : index
    %67 = memref.load %arg1[%c1_51, %c1_52] : memref<5x4xi32, #tpu.memory_space<smem>>
    %68 = arith.index_cast %67 : i32 to index
    %c0_53 = arith.constant 0 : index
    %69 = vector.load %arg3[%68, %c0_53] : memref<49x32xf32, #tpu.memory_space<vmem>>, vector<1x32xf32>
    %70 = arith.addf %66, %69 : vector<1x32xf32>
    %c1_54 = arith.constant 1 : index
    %c2_55 = arith.constant 2 : index
    %71 = memref.load %arg1[%c1_54, %c2_55] : memref<5x4xi32, #tpu.memory_space<smem>>
    %72 = arith.index_cast %71 : i32 to index
    %c0_56 = arith.constant 0 : index
    %73 = vector.load %arg3[%72, %c0_56] : memref<49x32xf32, #tpu.memory_space<vmem>>, vector<1x32xf32>
    %74 = arith.addf %70, %73 : vector<1x32xf32>
    %c1_57 = arith.constant 1 : index
    %c3_58 = arith.constant 3 : index
    %75 = memref.load %arg1[%c1_57, %c3_58] : memref<5x4xi32, #tpu.memory_space<smem>>
    %76 = arith.index_cast %75 : i32 to index
    %c0_59 = arith.constant 0 : index
    %77 = vector.load %arg3[%76, %c0_59] : memref<49x32xf32, #tpu.memory_space<vmem>>, vector<1x32xf32>
    %78 = arith.addf %74, %77 : vector<1x32xf32>
    %c1_60 = arith.constant 1 : index
    %c0_61 = arith.constant 0 : index
    %79 = vector.load %arg13[%c1_60, %c0_61] : memref<5x32xf32, #tpu.memory_space<vmem>>, vector<1x32xf32>
    tpu.vector_store %arg13[%c1_60, %c0_61], %78 {strides = array<i32>} : memref<5x32xf32, #tpu.memory_space<vmem>>, vector<1x32xf32>,
    %c2_62 = arith.constant 2 : index
    %c0_63 = arith.constant 0 : index
    %80 = memref.load %arg0[%c2_62, %c0_63] : memref<5x6xi32, #tpu.memory_space<smem>>
    %81 = arith.index_cast %80 : i32 to index
    %c0_64 = arith.constant 0 : index
    %82 = vector.load %arg2[%81, %c0_64] : memref<65x32xf32, #tpu.memory_space<vmem>>, vector<1x32xf32>
    %c2_65 = arith.constant 2 : index
    %c1_66 = arith.constant 1 : index
    %83 = memref.load %arg0[%c2_65, %c1_66] : memref<5x6xi32, #tpu.memory_space<smem>>
    %84 = arith.index_cast %83 : i32 to index
    %c0_67 = arith.constant 0 : index
    %85 = vector.load %arg2[%84, %c0_67] : memref<65x32xf32, #tpu.memory_space<vmem>>, vector<1x32xf32>
    %86 = arith.addf %82, %85 : vector<1x32xf32>
    %c2_68 = arith.constant 2 : index
    %c2_69 = arith.constant 2 : index
    %87 = memref.load %arg0[%c2_68, %c2_69] : memref<5x6xi32, #tpu.memory_space<smem>>
    %88 = arith.index_cast %87 : i32 to index
    %c0_70 = arith.constant 0 : index
    %89 = vector.load %arg2[%88, %c0_70] : memref<65x32xf32, #tpu.memory_space<vmem>>, vector<1x32xf32>
    %90 = arith.addf %86, %89 : vector<1x32xf32>
    %c2_71 = arith.constant 2 : index
    %c3_72 = arith.constant 3 : index
    %91 = memref.load %arg0[%c2_71, %c3_72] : memref<5x6xi32, #tpu.memory_space<smem>>
    %92 = arith.index_cast %91 : i32 to index
    %c0_73 = arith.constant 0 : index
    %93 = vector.load %arg2[%92, %c0_73] : memref<65x32xf32, #tpu.memory_space<vmem>>, vector<1x32xf32>
    %94 = arith.addf %90, %93 : vector<1x32xf32>
    %c2_74 = arith.constant 2 : index
    %c4_75 = arith.constant 4 : index
    %95 = memref.load %arg0[%c2_74, %c4_75] : memref<5x6xi32, #tpu.memory_space<smem>>
    %96 = arith.index_cast %95 : i32 to index
    %c0_76 = arith.constant 0 : index
    %97 = vector.load %arg2[%96, %c0_76] : memref<65x32xf32, #tpu.memory_space<vmem>>, vector<1x32xf32>
    %98 = arith.addf %94, %97 : vector<1x32xf32>
    %c2_77 = arith.constant 2 : index
    %c5_78 = arith.constant 5 : index
    %99 = memref.load %arg0[%c2_77, %c5_78] : memref<5x6xi32, #tpu.memory_space<smem>>
    %100 = arith.index_cast %99 : i32 to index
    %c0_79 = arith.constant 0 : index
    %101 = vector.load %arg2[%100, %c0_79] : memref<65x32xf32, #tpu.memory_space<vmem>>, vector<1x32xf32>
    %102 = arith.addf %98, %101 : vector<1x32xf32>
    %c2_80 = arith.constant 2 : index
    %c0_81 = arith.constant 0 : index
    %103 = vector.load %arg12[%c2_80, %c0_81] : memref<5x32xf32, #tpu.memory_space<vmem>>, vector<1x32xf32>
    tpu.vector_store %arg12[%c2_80, %c0_81], %102 {strides = array<i32>} : memref<5x32xf32, #tpu.memory_space<vmem>>, vector<1x32xf32>,
    %c2_82 = arith.constant 2 : index
    %c0_83 = arith.constant 0 : index
    %104 = memref.load %arg1[%c2_82, %c0_83] : memref<5x4xi32, #tpu.memory_space<smem>>
    %105 = arith.index_cast %104 : i32 to index
    %c0_84 = arith.constant 0 : index
    %106 = vector.load %arg3[%105, %c0_84] : memref<49x32xf32, #tpu.memory_space<vmem>>, vector<1x32xf32>
    %c2_85 = arith.constant 2 : index
    %c1_86 = arith.constant 1 : index
    %107 = memref.load %arg1[%c2_85, %c1_86] : memref<5x4xi32, #tpu.memory_space<smem>>
    %108 = arith.index_cast %107 : i32 to index
    %c0_87 = arith.constant 0 : index
    %109 = vector.load %arg3[%108, %c0_87] : memref<49x32xf32, #tpu.memory_space<vmem>>, vector<1x32xf32>
    %110 = arith.addf %106, %109 : vector<1x32xf32>
    %c2_88 = arith.constant 2 : index
    %c2_89 = arith.constant 2 : index
    %111 = memref.load %arg1[%c2_88, %c2_89] : memref<5x4xi32, #tpu.memory_space<smem>>
    %112 = arith.index_cast %111 : i32 to index
    %c0_90 = arith.constant 0 : index
    %113 = vector.load %arg3[%112, %c0_90] : memref<49x32xf32, #tpu.memory_space<vmem>>, vector<1x32xf32>
    %114 = arith.addf %110, %113 : vector<1x32xf32>
    %c2_91 = arith.constant 2 : index
    %c3_92 = arith.constant 3 : index
    %115 = memref.load %arg1[%c2_91, %c3_92] : memref<5x4xi32, #tpu.memory_space<smem>>
    %116 = arith.index_cast %115 : i32 to index
    %c0_93 = arith.constant 0 : index
    %117 = vector.load %arg3[%116, %c0_93] : memref<49x32xf32, #tpu.memory_space<vmem>>, vector<1x32xf32>
    %118 = arith.addf %114, %117 : vector<1x32xf32>
    %c2_94 = arith.constant 2 : index
    %c0_95 = arith.constant 0 : index
    %119 = vector.load %arg13[%c2_94, %c0_95] : memref<5x32xf32, #tpu.memory_space<vmem>>, vector<1x32xf32>
    tpu.vector_store %arg13[%c2_94, %c0_95], %118 {strides = array<i32>} : memref<5x32xf32, #tpu.memory_space<vmem>>, vector<1x32xf32>,
    %c3_96 = arith.constant 3 : index
    %c0_97 = arith.constant 0 : index
    %120 = memref.load %arg0[%c3_96, %c0_97] : memref<5x6xi32, #tpu.memory_space<smem>>
    %121 = arith.index_cast %120 : i32 to index
    %c0_98 = arith.constant 0 : index
    %122 = vector.load %arg2[%121, %c0_98] : memref<65x32xf32, #tpu.memory_space<vmem>>, vector<1x32xf32>
    %c3_99 = arith.constant 3 : index
    %c1_100 = arith.constant 1 : index
    %123 = memref.load %arg0[%c3_99, %c1_100] : memref<5x6xi32, #tpu.memory_space<smem>>
    %124 = arith.index_cast %123 : i32 to index
    %c0_101 = arith.constant 0 : index
    %125 = vector.load %arg2[%124, %c0_101] : memref<65x32xf32, #tpu.memory_space<vmem>>, vector<1x32xf32>
    %126 = arith.addf %122, %125 : vector<1x32xf32>
    %c3_102 = arith.constant 3 : index
    %c2_103 = arith.constant 2 : index
    %127 = memref.load %arg0[%c3_102, %c2_103] : memref<5x6xi32, #tpu.memory_space<smem>>
    %128 = arith.index_cast %127 : i32 to index
    %c0_104 = arith.constant 0 : index
    %129 = vector.load %arg2[%128, %c0_104] : memref<65x32xf32, #tpu.memory_space<vmem>>, vector<1x32xf32>
    %130 = arith.addf %126, %129 : vector<1x32xf32>
    %c3_105 = arith.constant 3 : index
    %c3_106 = arith.constant 3 : index
    %131 = memref.load %arg0[%c3_105, %c3_106] : memref<5x6xi32, #tpu.memory_space<smem>>
    %132 = arith.index_cast %131 : i32 to index
    %c0_107 = arith.constant 0 : index
    %133 = vector.load %arg2[%132, %c0_107] : memref<65x32xf32, #tpu.memory_space<vmem>>, vector<1x32xf32>
    %134 = arith.addf %130, %133 : vector<1x32xf32>
    %c3_108 = arith.constant 3 : index
    %c4_109 = arith.constant 4 : index
    %135 = memref.load %arg0[%c3_108, %c4_109] : memref<5x6xi32, #tpu.memory_space<smem>>
    %136 = arith.index_cast %135 : i32 to index
    %c0_110 = arith.constant 0 : index
    %137 = vector.load %arg2[%136, %c0_110] : memref<65x32xf32, #tpu.memory_space<vmem>>, vector<1x32xf32>
    %138 = arith.addf %134, %137 : vector<1x32xf32>
    %c3_111 = arith.constant 3 : index
    %c5_112 = arith.constant 5 : index
    %139 = memref.load %arg0[%c3_111, %c5_112] : memref<5x6xi32, #tpu.memory_space<smem>>
    %140 = arith.index_cast %139 : i32 to index
    %c0_113 = arith.constant 0 : index
    %141 = vector.load %arg2[%140, %c0_113] : memref<65x32xf32, #tpu.memory_space<vmem>>, vector<1x32xf32>
    %142 = arith.addf %138, %141 : vector<1x32xf32>
    %c3_114 = arith.constant 3 : index
    %c0_115 = arith.constant 0 : index
    %143 = vector.load %arg12[%c3_114, %c0_115] : memref<5x32xf32, #tpu.memory_space<vmem>>, vector<1x32xf32>
    tpu.vector_store %arg12[%c3_114, %c0_115], %142 {strides = array<i32>} : memref<5x32xf32, #tpu.memory_space<vmem>>, vector<1x32xf32>,
    %c3_116 = arith.constant 3 : index
    %c0_117 = arith.constant 0 : index
    %144 = memref.load %arg1[%c3_116, %c0_117] : memref<5x4xi32, #tpu.memory_space<smem>>
    %145 = arith.index_cast %144 : i32 to index
    %c0_118 = arith.constant 0 : index
    %146 = vector.load %arg3[%145, %c0_118] : memref<49x32xf32, #tpu.memory_space<vmem>>, vector<1x32xf32>
    %c3_119 = arith.constant 3 : index
    %c1_120 = arith.constant 1 : index
    %147 = memref.load %arg1[%c3_119, %c1_120] : memref<5x4xi32, #tpu.memory_space<smem>>
    %148 = arith.index_cast %147 : i32 to index
    %c0_121 = arith.constant 0 : index
    %149 = vector.load %arg3[%148, %c0_121] : memref<49x32xf32, #tpu.memory_space<vmem>>, vector<1x32xf32>
    %150 = arith.addf %146, %149 : vector<1x32xf32>
    %c3_122 = arith.constant 3 : index
    %c2_123 = arith.constant 2 : index
    %151 = memref.load %arg1[%c3_122, %c2_123] : memref<5x4xi32, #tpu.memory_space<smem>>
    %152 = arith.index_cast %151 : i32 to index
    %c0_124 = arith.constant 0 : index
    %153 = vector.load %arg3[%152, %c0_124] : memref<49x32xf32, #tpu.memory_space<vmem>>, vector<1x32xf32>
    %154 = arith.addf %150, %153 : vector<1x32xf32>
    %c3_125 = arith.constant 3 : index
    %c3_126 = arith.constant 3 : index
    %155 = memref.load %arg1[%c3_125, %c3_126] : memref<5x4xi32, #tpu.memory_space<smem>>
    %156 = arith.index_cast %155 : i32 to index
    %c0_127 = arith.constant 0 : index
    %157 = vector.load %arg3[%156, %c0_127] : memref<49x32xf32, #tpu.memory_space<vmem>>, vector<1x32xf32>
    %158 = arith.addf %154, %157 : vector<1x32xf32>
    %c3_128 = arith.constant 3 : index
    %c0_129 = arith.constant 0 : index
    %159 = vector.load %arg13[%c3_128, %c0_129] : memref<5x32xf32, #tpu.memory_space<vmem>>, vector<1x32xf32>
    tpu.vector_store %arg13[%c3_128, %c0_129], %158 {strides = array<i32>} : memref<5x32xf32, #tpu.memory_space<vmem>>, vector<1x32xf32>,
    %c4_130 = arith.constant 4 : index
    %c0_131 = arith.constant 0 : index
    %160 = memref.load %arg0[%c4_130, %c0_131] : memref<5x6xi32, #tpu.memory_space<smem>>
    %161 = arith.index_cast %160 : i32 to index
    %c0_132 = arith.constant 0 : index
    %162 = vector.load %arg2[%161, %c0_132] : memref<65x32xf32, #tpu.memory_space<vmem>>, vector<1x32xf32>
    %c4_133 = arith.constant 4 : index
    %c1_134 = arith.constant 1 : index
    %163 = memref.load %arg0[%c4_133, %c1_134] : memref<5x6xi32, #tpu.memory_space<smem>>
    %164 = arith.index_cast %163 : i32 to index
    %c0_135 = arith.constant 0 : index
    %165 = vector.load %arg2[%164, %c0_135] : memref<65x32xf32, #tpu.memory_space<vmem>>, vector<1x32xf32>
    %166 = arith.addf %162, %165 : vector<1x32xf32>
    %c4_136 = arith.constant 4 : index
    %c2_137 = arith.constant 2 : index
    %167 = memref.load %arg0[%c4_136, %c2_137] : memref<5x6xi32, #tpu.memory_space<smem>>
    %168 = arith.index_cast %167 : i32 to index
    %c0_138 = arith.constant 0 : index
    %169 = vector.load %arg2[%168, %c0_138] : memref<65x32xf32, #tpu.memory_space<vmem>>, vector<1x32xf32>
    %170 = arith.addf %166, %169 : vector<1x32xf32>
    %c4_139 = arith.constant 4 : index
    %c3_140 = arith.constant 3 : index
    %171 = memref.load %arg0[%c4_139, %c3_140] : memref<5x6xi32, #tpu.memory_space<smem>>
    %172 = arith.index_cast %171 : i32 to index
    %c0_141 = arith.constant 0 : index
    %173 = vector.load %arg2[%172, %c0_141] : memref<65x32xf32, #tpu.memory_space<vmem>>, vector<1x32xf32>
    %174 = arith.addf %170, %173 : vector<1x32xf32>
    %c4_142 = arith.constant 4 : index
    %c4_143 = arith.constant 4 : index
    %175 = memref.load %arg0[%c4_142, %c4_143] : memref<5x6xi32, #tpu.memory_space<smem>>
    %176 = arith.index_cast %175 : i32 to index
    %c0_144 = arith.constant 0 : index
    %177 = vector.load %arg2[%176, %c0_144] : memref<65x32xf32, #tpu.memory_space<vmem>>, vector<1x32xf32>
    %178 = arith.addf %174, %177 : vector<1x32xf32>
    %c4_145 = arith.constant 4 : index
    %c5_146 = arith.constant 5 : index
    %179 = memref.load %arg0[%c4_145, %c5_146] : memref<5x6xi32, #tpu.memory_space<smem>>
    %180 = arith.index_cast %179 : i32 to index
    %c0_147 = arith.constant 0 : index
    %181 = vector.load %arg2[%180, %c0_147] : memref<65x32xf32, #tpu.memory_space<vmem>>, vector<1x32xf32>
    %182 = arith.addf %178, %181 : vector<1x32xf32>
    %c4_148 = arith.constant 4 : index
    %c0_149 = arith.constant 0 : index
    %183 = vector.load %arg12[%c4_148, %c0_149] : memref<5x32xf32, #tpu.memory_space<vmem>>, vector<1x32xf32>
    tpu.vector_store %arg12[%c4_148, %c0_149], %182 {strides = array<i32>} : memref<5x32xf32, #tpu.memory_space<vmem>>, vector<1x32xf32>,
    %c4_150 = arith.constant 4 : index
    %c0_151 = arith.constant 0 : index
    %184 = memref.load %arg1[%c4_150, %c0_151] : memref<5x4xi32, #tpu.memory_space<smem>>
    %185 = arith.index_cast %184 : i32 to index
    %c0_152 = arith.constant 0 : index
    %186 = vector.load %arg3[%185, %c0_152] : memref<49x32xf32, #tpu.memory_space<vmem>>, vector<1x32xf32>
    %c4_153 = arith.constant 4 : index
    %c1_154 = arith.constant 1 : index
    %187 = memref.load %arg1[%c4_153, %c1_154] : memref<5x4xi32, #tpu.memory_space<smem>>
    %188 = arith.index_cast %187 : i32 to index
    %c0_155 = arith.constant 0 : index
    %189 = vector.load %arg3[%188, %c0_155] : memref<49x32xf32, #tpu.memory_space<vmem>>, vector<1x32xf32>
    %190 = arith.addf %186, %189 : vector<1x32xf32>
    %c4_156 = arith.constant 4 : index
    %c2_157 = arith.constant 2 : index
    %191 = memref.load %arg1[%c4_156, %c2_157] : memref<5x4xi32, #tpu.memory_space<smem>>
    %192 = arith.index_cast %191 : i32 to index
    %c0_158 = arith.constant 0 : index
    %193 = vector.load %arg3[%192, %c0_158] : memref<49x32xf32, #tpu.memory_space<vmem>>, vector<1x32xf32>
    %194 = arith.addf %190, %193 : vector<1x32xf32>
    %c4_159 = arith.constant 4 : index
    %c3_160 = arith.constant 3 : index
    %195 = memref.load %arg1[%c4_159, %c3_160] : memref<5x4xi32, #tpu.memory_space<smem>>
    %196 = arith.index_cast %195 : i32 to index
    %c0_161 = arith.constant 0 : index
    %197 = vector.load %arg3[%196, %c0_161] : memref<49x32xf32, #tpu.memory_space<vmem>>, vector<1x32xf32>
    %198 = arith.addf %194, %197 : vector<1x32xf32>
    %c4_162 = arith.constant 4 : index
    %c0_163 = arith.constant 0 : index
    %199 = vector.load %arg13[%c4_162, %c0_163] : memref<5x32xf32, #tpu.memory_space<vmem>>, vector<1x32xf32>
    tpu.vector_store %arg13[%c4_162, %c0_163], %198 {strides = array<i32>} : memref<5x32xf32, #tpu.memory_space<vmem>>, vector<1x32xf32>,
    %c0_164 = arith.constant 0 : index
    %c0_165 = arith.constant 0 : index
    %200 = vector.load %arg12[%c0_164, %c0_165] : memref<5x32xf32, #tpu.memory_space<vmem>>, vector<5x32xf32>
    %c0_166 = arith.constant 0 : index
    %c0_167 = arith.constant 0 : index
    %201 = vector.load %arg4[%c0_166, %c0_167] : memref<32x384xf32, #tpu.memory_space<vmem>>, vector<32x384xf32>
    %cst = arith.constant dense<0.000000e+00> : vector<5x384xf32>
    %202 = tpu.matmul %200, %201, %cst {dimension_numbers = #tpu.dot_dimension_numbers<[1], [0], [0], [1], [0, 0, 1, 1], [], []>} : vector<5x32xf32>, vector<32x384xf32>, vector<5x384xf32> -> vector<5x384xf32>
    %c0_168 = arith.constant 0 : index
    %c0_169 = arith.constant 0 : index
    %203 = vector.load %arg13[%c0_168, %c0_169] : memref<5x32xf32, #tpu.memory_space<vmem>>, vector<5x32xf32>
    %c0_170 = arith.constant 0 : index
    %c0_171 = arith.constant 0 : index
    %204 = vector.load %arg5[%c0_170, %c0_171] : memref<32x384xf32, #tpu.memory_space<vmem>>, vector<32x384xf32>
    %cst_172 = arith.constant dense<0.000000e+00> : vector<5x384xf32>
    %205 = tpu.matmul %203, %204, %cst_172 {dimension_numbers = #tpu.dot_dimension_numbers<[1], [0], [0], [1], [0, 0, 1, 1], [], []>} : vector<5x32xf32>, vector<32x384xf32>, vector<5x384xf32> -> vector<5x384xf32>
    %206 = arith.addf %202, %205 : vector<5x384xf32>
    %c0_173 = arith.constant 0 : index
    %c0_174 = arith.constant 0 : index
    %207 = vector.load %arg7[%c0_173, %c0_174] : memref<1x384xf32, #tpu.memory_space<vmem>>, vector<1x384xf32>
    %208 = vector.broadcast %207 : vector<1x384xf32> to vector<5x384xf32>
    %209 = arith.addf %206, %208 : vector<5x384xf32>
    %c0_175 = arith.constant 0 : index
    %c0_176 = arith.constant 0 : index
    %210 = vector.load %arg14[%c0_175, %c0_176] : memref<5x384xf32, #tpu.memory_space<vmem>>, vector<5x384xf32>
    tpu.vector_store %arg14[%c0_175, %c0_176], %209 {strides = array<i32>} : memref<5x384xf32, #tpu.memory_space<vmem>>, vector<5x384xf32>,
    %c0_177 = arith.constant 0 : index
    %c0_178 = arith.constant 0 : index
    %211 = vector.load %arg6[%c0_177, %c0_178] : memref<128x384xf32, #tpu.memory_space<vmem>>, vector<128x384xf32>
    %c0_179 = arith.constant 0 : index
    %c0_180 = arith.constant 0 : index
    %212 = vector.load %arg8[%c0_179, %c0_180] : memref<1x128xf32, #tpu.memory_space<vmem>>, vector<1x128xf32>
    %cst_181 = arith.constant 0.000000e+00 : f32
    %213 = vector.broadcast %cst_181 : f32 to vector<1x128xf32>
    %c0_182 = arith.constant 0 : index
    %c0_183 = arith.constant 0 : index
    %214 = vector.load %arg14[%c0_182, %c0_183] : memref<5x384xf32, #tpu.memory_space<vmem>>, vector<1x384xf32>
    %cst_184 = arith.constant dense<0.000000e+00> : vector<1x384xf32>
    %215 = tpu.matmul %213, %211, %cst_184 {dimension_numbers = #tpu.dot_dimension_numbers<[1], [0], [0], [1], [0, 0, 1, 1], [], []>} : vector<1x128xf32>, vector<128x384xf32>, vector<1x384xf32> -> vector<1x384xf32>
    %216 = vector.extract_strided_slice %214 {offsets = [0, 0], sizes = [1, 256], strides = [1, 1]} : vector<1x384xf32> to vector<1x256xf32>
    %217 = vector.extract_strided_slice %215 {offsets = [0, 0], sizes = [1, 256], strides = [1, 1]} : vector<1x384xf32> to vector<1x256xf32>
    %218 = arith.addf %216, %217 : vector<1x256xf32>
    %219 = arith.negf %218 : vector<1x256xf32>
    %220 = math.exp %219 : vector<1x256xf32>
    %cst_185 = arith.constant 1.000000e+00 : f32
    %221 = vector.broadcast %cst_185 : f32 to vector<1x256xf32>
    %222 = arith.addf %221, %220 : vector<1x256xf32>
    %223 = arith.divf %221, %222 : vector<1x256xf32>
    %224 = vector.extract_strided_slice %223 {offsets = [0, 0], sizes = [1, 128], strides = [1, 1]} : vector<1x256xf32> to vector<1x128xf32>
    %225 = vector.extract_strided_slice %223 {offsets = [0, 128], sizes = [1, 128], strides = [1, 1]} : vector<1x256xf32> to vector<1x128xf32>
    %226 = vector.extract_strided_slice %214 {offsets = [0, 256], sizes = [1, 128], strides = [1, 1]} : vector<1x384xf32> to vector<1x128xf32>
    %227 = vector.extract_strided_slice %215 {offsets = [0, 256], sizes = [1, 128], strides = [1, 1]} : vector<1x384xf32> to vector<1x128xf32>
    %228 = arith.addf %227, %212 : vector<1x128xf32>
    %229 = arith.mulf %224, %228 : vector<1x128xf32>
    %230 = arith.addf %226, %229 : vector<1x128xf32>
    %231 = math.tanh %230 : vector<1x128xf32>
    %232 = arith.subf %213, %231 : vector<1x128xf32>
    %233 = arith.mulf %225, %232 : vector<1x128xf32>
    %234 = arith.addf %231, %233 : vector<1x128xf32>
    %c1_186 = arith.constant 1 : index
    %c0_187 = arith.constant 0 : index
    %235 = vector.load %arg14[%c1_186, %c0_187] : memref<5x384xf32, #tpu.memory_space<vmem>>, vector<1x384xf32>
    %cst_188 = arith.constant dense<0.000000e+00> : vector<1x384xf32>
    %236 = tpu.matmul %234, %211, %cst_188 {dimension_numbers = #tpu.dot_dimension_numbers<[1], [0], [0], [1], [0, 0, 1, 1], [], []>} : vector<1x128xf32>, vector<128x384xf32>, vector<1x384xf32> -> vector<1x384xf32>
    %237 = vector.extract_strided_slice %235 {offsets = [0, 0], sizes = [1, 256], strides = [1, 1]} : vector<1x384xf32> to vector<1x256xf32>
    %238 = vector.extract_strided_slice %236 {offsets = [0, 0], sizes = [1, 256], strides = [1, 1]} : vector<1x384xf32> to vector<1x256xf32>
    %239 = arith.addf %237, %238 : vector<1x256xf32>
    %240 = arith.negf %239 : vector<1x256xf32>
    %241 = math.exp %240 : vector<1x256xf32>
    %cst_189 = arith.constant 1.000000e+00 : f32
    %242 = vector.broadcast %cst_189 : f32 to vector<1x256xf32>
    %243 = arith.addf %242, %241 : vector<1x256xf32>
    %244 = arith.divf %242, %243 : vector<1x256xf32>
    %245 = vector.extract_strided_slice %244 {offsets = [0, 0], sizes = [1, 128], strides = [1, 1]} : vector<1x256xf32> to vector<1x128xf32>
    %246 = vector.extract_strided_slice %244 {offsets = [0, 128], sizes = [1, 128], strides = [1, 1]} : vector<1x256xf32> to vector<1x128xf32>
    %247 = vector.extract_strided_slice %235 {offsets = [0, 256], sizes = [1, 128], strides = [1, 1]} : vector<1x384xf32> to vector<1x128xf32>
    %248 = vector.extract_strided_slice %236 {offsets = [0, 256], sizes = [1, 128], strides = [1, 1]} : vector<1x384xf32> to vector<1x128xf32>
    %249 = arith.addf %248, %212 : vector<1x128xf32>
    %250 = arith.mulf %245, %249 : vector<1x128xf32>
    %251 = arith.addf %247, %250 : vector<1x128xf32>
    %252 = math.tanh %251 : vector<1x128xf32>
    %253 = arith.subf %234, %252 : vector<1x128xf32>
    %254 = arith.mulf %246, %253 : vector<1x128xf32>
    %255 = arith.addf %252, %254 : vector<1x128xf32>
    %c2_190 = arith.constant 2 : index
    %c0_191 = arith.constant 0 : index
    %256 = vector.load %arg14[%c2_190, %c0_191] : memref<5x384xf32, #tpu.memory_space<vmem>>, vector<1x384xf32>
    %cst_192 = arith.constant dense<0.000000e+00> : vector<1x384xf32>
    %257 = tpu.matmul %255, %211, %cst_192 {dimension_numbers = #tpu.dot_dimension_numbers<[1], [0], [0], [1], [0, 0, 1, 1], [], []>} : vector<1x128xf32>, vector<128x384xf32>, vector<1x384xf32> -> vector<1x384xf32>
    %258 = vector.extract_strided_slice %256 {offsets = [0, 0], sizes = [1, 256], strides = [1, 1]} : vector<1x384xf32> to vector<1x256xf32>
    %259 = vector.extract_strided_slice %257 {offsets = [0, 0], sizes = [1, 256], strides = [1, 1]} : vector<1x384xf32> to vector<1x256xf32>
    %260 = arith.addf %258, %259 : vector<1x256xf32>
    %261 = arith.negf %260 : vector<1x256xf32>
    %262 = math.exp %261 : vector<1x256xf32>
    %cst_193 = arith.constant 1.000000e+00 : f32
    %263 = vector.broadcast %cst_193 : f32 to vector<1x256xf32>
    %264 = arith.addf %263, %262 : vector<1x256xf32>
    %265 = arith.divf %263, %264 : vector<1x256xf32>
    %266 = vector.extract_strided_slice %265 {offsets = [0, 0], sizes = [1, 128], strides = [1, 1]} : vector<1x256xf32> to vector<1x128xf32>
    %267 = vector.extract_strided_slice %265 {offsets = [0, 128], sizes = [1, 128], strides = [1, 1]} : vector<1x256xf32> to vector<1x128xf32>
    %268 = vector.extract_strided_slice %256 {offsets = [0, 256], sizes = [1, 128], strides = [1, 1]} : vector<1x384xf32> to vector<1x128xf32>
    %269 = vector.extract_strided_slice %257 {offsets = [0, 256], sizes = [1, 128], strides = [1, 1]} : vector<1x384xf32> to vector<1x128xf32>
    %270 = arith.addf %269, %212 : vector<1x128xf32>
    %271 = arith.mulf %266, %270 : vector<1x128xf32>
    %272 = arith.addf %268, %271 : vector<1x128xf32>
    %273 = math.tanh %272 : vector<1x128xf32>
    %274 = arith.subf %255, %273 : vector<1x128xf32>
    %275 = arith.mulf %267, %274 : vector<1x128xf32>
    %276 = arith.addf %273, %275 : vector<1x128xf32>
    %c3_194 = arith.constant 3 : index
    %c0_195 = arith.constant 0 : index
    %277 = vector.load %arg14[%c3_194, %c0_195] : memref<5x384xf32, #tpu.memory_space<vmem>>, vector<1x384xf32>
    %cst_196 = arith.constant dense<0.000000e+00> : vector<1x384xf32>
    %278 = tpu.matmul %276, %211, %cst_196 {dimension_numbers = #tpu.dot_dimension_numbers<[1], [0], [0], [1], [0, 0, 1, 1], [], []>} : vector<1x128xf32>, vector<128x384xf32>, vector<1x384xf32> -> vector<1x384xf32>
    %279 = vector.extract_strided_slice %277 {offsets = [0, 0], sizes = [1, 256], strides = [1, 1]} : vector<1x384xf32> to vector<1x256xf32>
    %280 = vector.extract_strided_slice %278 {offsets = [0, 0], sizes = [1, 256], strides = [1, 1]} : vector<1x384xf32> to vector<1x256xf32>
    %281 = arith.addf %279, %280 : vector<1x256xf32>
    %282 = arith.negf %281 : vector<1x256xf32>
    %283 = math.exp %282 : vector<1x256xf32>
    %cst_197 = arith.constant 1.000000e+00 : f32
    %284 = vector.broadcast %cst_197 : f32 to vector<1x256xf32>
    %285 = arith.addf %284, %283 : vector<1x256xf32>
    %286 = arith.divf %284, %285 : vector<1x256xf32>
    %287 = vector.extract_strided_slice %286 {offsets = [0, 0], sizes = [1, 128], strides = [1, 1]} : vector<1x256xf32> to vector<1x128xf32>
    %288 = vector.extract_strided_slice %286 {offsets = [0, 128], sizes = [1, 128], strides = [1, 1]} : vector<1x256xf32> to vector<1x128xf32>
    %289 = vector.extract_strided_slice %277 {offsets = [0, 256], sizes = [1, 128], strides = [1, 1]} : vector<1x384xf32> to vector<1x128xf32>
    %290 = vector.extract_strided_slice %278 {offsets = [0, 256], sizes = [1, 128], strides = [1, 1]} : vector<1x384xf32> to vector<1x128xf32>
    %291 = arith.addf %290, %212 : vector<1x128xf32>
    %292 = arith.mulf %287, %291 : vector<1x128xf32>
    %293 = arith.addf %289, %292 : vector<1x128xf32>
    %294 = math.tanh %293 : vector<1x128xf32>
    %295 = arith.subf %276, %294 : vector<1x128xf32>
    %296 = arith.mulf %288, %295 : vector<1x128xf32>
    %297 = arith.addf %294, %296 : vector<1x128xf32>
    %c4_198 = arith.constant 4 : index
    %c0_199 = arith.constant 0 : index
    %298 = vector.load %arg14[%c4_198, %c0_199] : memref<5x384xf32, #tpu.memory_space<vmem>>, vector<1x384xf32>
    %cst_200 = arith.constant dense<0.000000e+00> : vector<1x384xf32>
    %299 = tpu.matmul %297, %211, %cst_200 {dimension_numbers = #tpu.dot_dimension_numbers<[1], [0], [0], [1], [0, 0, 1, 1], [], []>} : vector<1x128xf32>, vector<128x384xf32>, vector<1x384xf32> -> vector<1x384xf32>
    %300 = vector.extract_strided_slice %298 {offsets = [0, 0], sizes = [1, 256], strides = [1, 1]} : vector<1x384xf32> to vector<1x256xf32>
    %301 = vector.extract_strided_slice %299 {offsets = [0, 0], sizes = [1, 256], strides = [1, 1]} : vector<1x384xf32> to vector<1x256xf32>
    %302 = arith.addf %300, %301 : vector<1x256xf32>
    %303 = arith.negf %302 : vector<1x256xf32>
    %304 = math.exp %303 : vector<1x256xf32>
    %cst_201 = arith.constant 1.000000e+00 : f32
    %305 = vector.broadcast %cst_201 : f32 to vector<1x256xf32>
    %306 = arith.addf %305, %304 : vector<1x256xf32>
    %307 = arith.divf %305, %306 : vector<1x256xf32>
    %308 = vector.extract_strided_slice %307 {offsets = [0, 0], sizes = [1, 128], strides = [1, 1]} : vector<1x256xf32> to vector<1x128xf32>
    %309 = vector.extract_strided_slice %307 {offsets = [0, 128], sizes = [1, 128], strides = [1, 1]} : vector<1x256xf32> to vector<1x128xf32>
    %310 = vector.extract_strided_slice %298 {offsets = [0, 256], sizes = [1, 128], strides = [1, 1]} : vector<1x384xf32> to vector<1x128xf32>
    %311 = vector.extract_strided_slice %299 {offsets = [0, 256], sizes = [1, 128], strides = [1, 1]} : vector<1x384xf32> to vector<1x128xf32>
    %312 = arith.addf %311, %212 : vector<1x128xf32>
    %313 = arith.mulf %308, %312 : vector<1x128xf32>
    %314 = arith.addf %310, %313 : vector<1x128xf32>
    %315 = math.tanh %314 : vector<1x128xf32>
    %316 = arith.subf %297, %315 : vector<1x128xf32>
    %317 = arith.mulf %309, %316 : vector<1x128xf32>
    %318 = arith.addf %315, %317 : vector<1x128xf32>
    %cst_202 = arith.constant 0.000000e+00 : f32
    %319 = vector.broadcast %cst_202 : f32 to vector<1x128xf32>
    %320 = arith.maximumf %318, %319 : vector<1x128xf32>
    %c0_203 = arith.constant 0 : index
    %c0_204 = arith.constant 0 : index
    %321 = vector.load %arg9[%c0_203, %c0_204] : memref<128x32xf32, #tpu.memory_space<vmem>>, vector<128x32xf32>
    %cst_205 = arith.constant dense<0.000000e+00> : vector<1x32xf32>
    %322 = tpu.matmul %320, %321, %cst_205 {dimension_numbers = #tpu.dot_dimension_numbers<[1], [0], [0], [1], [0, 0, 1, 1], [], []>} : vector<1x128xf32>, vector<128x32xf32>, vector<1x32xf32> -> vector<1x32xf32>
    %c0_206 = arith.constant 0 : index
    %c0_207 = arith.constant 0 : index
    %323 = vector.load %arg10[%c0_206, %c0_207] : memref<1x32xf32, #tpu.memory_space<vmem>>, vector<1x32xf32>
    %324 = arith.addf %322, %323 : vector<1x32xf32>
    %c0_208 = arith.constant 0 : index
    %c0_209 = arith.constant 0 : index
    %325 = vector.load %arg11[%c0_208, %c0_209] : memref<1x32xf32, #tpu.memory_space<vmem>>, vector<1x32xf32>
    tpu.vector_store %arg11[%c0_208, %c0_209], %324 {strides = array<i32>} : memref<1x32xf32, #tpu.memory_space<vmem>>, vector<1x32xf32>,
    return
  }
}

</mosaic_0001>

<llo_original>
// kernel: tpu_custom_call.1
$region0: #{tpu_custom_call.1}
  #allocation0 [shape = 'u32[]', space=smem, size = 0x4, offset = 0x4, fixed_abs, tag = 'smem constant byte address 0x4 - core index']
  #allocation1 [shape = 'u32[144,128]{1,0:T(1,128)}', space=vmem, size = 0x12000, scoped, tag = 'internal scratch']
  #allocation2 [shape = 'f32[5,32]{1,0:T(8,128)}', space=vmem, size = 0x1000, scoped, tag = 'scratch operand']
  #allocation3 [shape = 'f32[5,32]{1,0:T(8,128)}', space=vmem, size = 0x1000, scoped, tag = 'scratch operand']
  #allocation4 [shape = 'f32[5,384]{1,0:T(8,128)}', space=vmem, size = 0x3000, scoped, tag = 'scratch operand']
  %s0 = inlined_call_operand.hbm [shape: s32[5,6], index: 0, kind: input, shape index: {}]
  %s1 = inlined_call_operand.vmem [shape: s32[5,4], index: 1, kind: input, shape index: {}]
  %s2 = inlined_call_operand.vmem [shape: f32[65,32], index: 2, kind: input, shape index: {}]
  %s3 = inlined_call_operand.vmem [shape: f32[49,32], index: 3, kind: input, shape index: {}]
  %s4 = inlined_call_operand.hbm [shape: f32[32,384], index: 4, kind: input, shape index: {}]
  %s5 = inlined_call_operand.hbm [shape: f32[32,384], index: 5, kind: input, shape index: {}]
  %s6 = inlined_call_operand.vmem [shape: f32[128,384], index: 6, kind: input, shape index: {}]
  %s7 = inlined_call_operand.hbm [shape: f32[1,384], index: 7, kind: input, shape index: {}]
  %s8 = inlined_call_operand.vmem [shape: f32[1,128], index: 8, kind: input, shape index: {}]
  %s9 = inlined_call_operand.vmem [shape: f32[128,32], index: 9, kind: input, shape index: {}]
  %s10 = inlined_call_operand.vmem [shape: f32[1,32], index: 10, kind: input, shape index: {}]
  %s11 = inlined_call_operand.hbm [shape: f32[1,32], index: 11, kind: output, shape index: {}]
  %s12 = sld [smem:[#allocation0]]
  $region74: #{tpu_custom_call.1} parent=0
    _
  %s14 = ssub.s32 1, %s12
  %s15 = scalar_select 0, %s14, %s12
  $region1: #{tpu_custom_call.1} parent=0
    #allocation5 [shape = 'u8[4096]{0}', space=smem, size = 0x1000, scoped, tag = 'input window, operand 0, single buffered']
    #allocation6 [shape = 's32[1]{0}', space=sflag, size = 0x4, scoped, tag = 'scoped memory for tpu_custom_call.1']
    #allocation7 [shape = 's32[1]{0}', space=sflag, size = 0x4, scoped, tag = 'scoped memory for tpu_custom_call.1']
    #allocation8 [shape = 's32[1]{0}', space=sflag, size = 0x4, scoped, tag = 'scoped memory for tpu_custom_call.1']
    #allocation9 [shape = 's32[1]{0}', space=sflag, size = 0x4, scoped, tag = 'scoped memory for tpu_custom_call.1']
    #allocation10 [shape = 'u8[4096]{0}', space=smem, size = 0x1000, scoped, tag = 'input window, operand 1, single buffered']
    #allocation11 [shape = 'u8[49152]{0}', space=vmem, size = 0xc000, scoped, tag = 'input window, operand 4, single buffered']
    #allocation12 [shape = 'u8[49152]{0}', space=vmem, size = 0xc000, scoped, tag = 'input window, operand 5, single buffered']
    #allocation13 [shape = 's32[1]{0}', space=sflag, size = 0x4, scoped, tag = 'scoped memory for tpu_custom_call.1']
    #allocation14 [shape = 'u8[1536]{0}', space=vmem, size = 0x800, scoped, tag = 'input window, operand 7, single buffered']
    #allocation15 [shape = 'u8[512]{0}', space=vmem, size = 0x400, scoped, tag = 'output window, operand 0, single buffered']
    %16 = vsyncpa [#allocation8], 0
    %17 = vsyncpa [#allocation9], 0
    %18 = vsyncpa [#allocation6], 0
    %19 = vsyncpa [#allocation13], 0
    %20 = vsyncpa [#allocation7], 0
    // Predicated region
    $region2: #{tpu_custom_call.1} parent=1 // pred_check
      _
    $region3: #{tpu_custom_call.1} parent=1 // pred_check_branch
      %22 = sbr.rel (0) target = $region5
    $region4: #{tpu_custom_call.1} parent=1 // pred_region
      %s24 = ssub.s32 128, 128
      %25 = vsyncadd [#allocation8], %s24
      %28 = dma.hbm_to_smem %s0, 128, [#allocation5], [#allocation8]
    $region5: #{tpu_custom_call.1} parent=1 // pred_fallthru
      _
    // Predicated region
    $region6: #{tpu_custom_call.1} parent=1 // pred_check
      _
    $region7: #{tpu_custom_call.1} parent=1 // pred_check_branch
      %30 = sbr.rel (0) target = $region9
    $region8: #{tpu_custom_call.1} parent=1 // pred_region
      %s32 = ssub.s32 128, 128
      %33 = vsyncadd [#allocation9], %s32
      %s35 = sshll.u32 %s1, 4
      %s36 = int_to_ptr.vmem [resolvable:$true] %s35
      %38 = dma.vmem_to_smem %s36, 128, [#allocation10], [#allocation9]
    $region9: #{tpu_custom_call.1} parent=1 // pred_fallthru
      _
    // Predicated region
    $region10: #{tpu_custom_call.1} parent=1 // pred_check
      _
    $region11: #{tpu_custom_call.1} parent=1 // pred_check_branch
      %40 = sbr.rel (0) target = $region13
    $region12: #{tpu_custom_call.1} parent=1 // pred_region
      _
    $region13: #{tpu_custom_call.1} parent=1 // pred_fallthru
      _
    // Predicated region
    $region14: #{tpu_custom_call.1} parent=1 // pred_check
      _
    $region15: #{tpu_custom_call.1} parent=1 // pred_check_branch
      %42 = sbr.rel (0) target = $region17
    $region16: #{tpu_custom_call.1} parent=1 // pred_region
      _
    $region17: #{tpu_custom_call.1} parent=1 // pred_fallthru
      _
    // Predicated region
    $region18: #{tpu_custom_call.1} parent=1 // pred_check
      _
    $region19: #{tpu_custom_call.1} parent=1 // pred_check_branch
      %44 = sbr.rel (0) target = $region21
    $region20: #{tpu_custom_call.1} parent=1 // pred_region
      %s46 = ssub.s32 1536, 1536
      %47 = vsyncadd [#allocation6], %s46
      %s48 = sshll.u32 [#allocation11], 4
      %s49 = int_to_ptr.vmem [resolvable:$true] %s48
      %54 = dma.hbm_to_vmem [thread:$0]  %s4, 1536, %s49, [#allocation6], 384, 384, 24
    $region21: #{tpu_custom_call.1} parent=1 // pred_fallthru
      _
    // Predicated region
    $region22: #{tpu_custom_call.1} parent=1 // pred_check
      _
    $region23: #{tpu_custom_call.1} parent=1 // pred_check_branch
      %56 = sbr.rel (0) target = $region25
    $region24: #{tpu_custom_call.1} parent=1 // pred_region
      %s58 = ssub.s32 1536, 1536
      %59 = vsyncadd [#allocation13], %s58
      %s60 = sshll.u32 [#allocation12], 4
      %s61 = int_to_ptr.vmem [resolvable:$true] %s60
      %66 = dma.hbm_to_vmem [thread:$0]  %s5, 1536, %s61, [#allocation13], 384, 384, 24
    $region25: #{tpu_custom_call.1} parent=1 // pred_fallthru
      _
    // Predicated region
    $region26: #{tpu_custom_call.1} parent=1 // pred_check
      _
    $region27: #{tpu_custom_call.1} parent=1 // pred_check_branch
      %68 = sbr.rel (0) target = $region29
    $region28: #{tpu_custom_call.1} parent=1 // pred_region
      _
    $region29: #{tpu_custom_call.1} parent=1 // pred_fallthru
      _
    // Predicated region
    $region30: #{tpu_custom_call.1} parent=1 // pred_check
      _
    $region31: #{tpu_custom_call.1} parent=1 // pred_check_branch
      %70 = sbr.rel (0) target = $region33
    $region32: #{tpu_custom_call.1} parent=1 // pred_region
      %s72 = ssub.s32 48, 48
      %73 = vsyncadd [#allocation13], %s72
      %s75 = sshll.u32 [#allocation14], 4
      %s76 = int_to_ptr.vmem [resolvable:$true] %s75
      %78 = dma.hbm_to_vmem [thread:$0]  %s7, 48, %s76, [#allocation13]
    $region33: #{tpu_custom_call.1} parent=1 // pred_fallthru
      _
    // Predicated region
    $region34: #{tpu_custom_call.1} parent=1 // pred_check
      _
    $region35: #{tpu_custom_call.1} parent=1 // pred_check_branch
      %80 = sbr.rel (0) target = $region37
    $region36: #{tpu_custom_call.1} parent=1 // pred_region
      _
    $region37: #{tpu_custom_call.1} parent=1 // pred_fallthru
      _
    // Predicated region
    $region38: #{tpu_custom_call.1} parent=1 // pred_check
      _
    $region39: #{tpu_custom_call.1} parent=1 // pred_check_branch
      %82 = sbr.rel (0) target = $region41
    $region40: #{tpu_custom_call.1} parent=1 // pred_region
      _
    $region41: #{tpu_custom_call.1} parent=1 // pred_fallthru
      _
    // Predicated region
    $region42: #{tpu_custom_call.1} parent=1 // pred_check
      _
    $region43: #{tpu_custom_call.1} parent=1 // pred_check_branch
      %84 = sbr.rel (0) target = $region45
    $region44: #{tpu_custom_call.1} parent=1 // pred_region
      _
    $region45: #{tpu_custom_call.1} parent=1 // pred_fallthru
      _
    // Predicated region
    $region46: #{tpu_custom_call.1} parent=1 // pred_check
      _
    $region47: #{tpu_custom_call.1} parent=1 // pred_check_branch
      %86 = sbr.rel (0) target = $region49
    $region48: #{tpu_custom_call.1} parent=1 // pred_region
      %87 = dma.done [#allocation8], 128
    $region49: #{tpu_custom_call.1} parent=1 // pred_fallthru
      _
    // Predicated region
    $region50: #{tpu_custom_call.1} parent=1 // pred_check
      _
    $region51: #{tpu_custom_call.1} parent=1 // pred_check_branch
      %89 = sbr.rel (0) target = $region53
    $region52: #{tpu_custom_call.1} parent=1 // pred_region
      %90 = dma.done [#allocation9], 128
    $region53: #{tpu_custom_call.1} parent=1 // pred_fallthru
      _
    // Predicated region
    $region54: #{tpu_custom_call.1} parent=1 // pred_check
      _
    $region55: #{tpu_custom_call.1} parent=1 // pred_check_branch
      %92 = sbr.rel (0) target = $region57
    $region56: #{tpu_custom_call.1} parent=1 // pred_region
      %93 = dma.done [#allocation6], 1536
    $region57: #{tpu_custom_call.1} parent=1 // pred_fallthru
      _
    // Predicated region
    $region58: #{tpu_custom_call.1} parent=1 // pred_check
      _
    $region59: #{tpu_custom_call.1} parent=1 // pred_check_branch
      %95 = sbr.rel (0) target = $region61
    $region60: #{tpu_custom_call.1} parent=1 // pred_region
      %96 = dma.done [#allocation13], 1536
    $region61: #{tpu_custom_call.1} parent=1 // pred_fallthru
      _
    // Predicated region
    $region62: #{tpu_custom_call.1} parent=1 // pred_check
      _
    $region63: #{tpu_custom_call.1} parent=1 // pred_check_branch
      %98 = sbr.rel (0) target = $region65
    $region64: #{tpu_custom_call.1} parent=1 // pred_region
      %99 = dma.done [#allocation13], 48
    $region65: #{tpu_custom_call.1} parent=1 // pred_fallthru
      _
    %100 = sfence
    %s101 = sld [smem:[#allocation5]]
    %s102 = scalar_lea.vmem %s2, %s101
    %v103 = vld [vmem:[%s102] sm:$0x1]
    %s104 = sld [smem:[#allocation5 + $0x1]]
    %s105 = scalar_lea.vmem %s2, %s104
    %v106 = vld [vmem:[%s105] sm:$0x1]
    %v107 = vadd.f32 %v103, %v106
    %s108 = sld [smem:[#allocation5 + $0x2]]
    %s109 = scalar_lea.vmem %s2, %s108
    %v110 = vld [vmem:[%s109] sm:$0x1]
    %v111 = vadd.f32 %v107, %v110
    %s112 = sld [smem:[#allocation5 + $0x3]]
    %s113 = scalar_lea.vmem %s2, %s112
    %v114 = vld [vmem:[%s113] sm:$0x1]
    %v115 = vadd.f32 %v111, %v114
    %s116 = sld [smem:[#allocation5 + $0x4]]
    %s117 = scalar_lea.vmem %s2, %s116
    %v118 = vld [vmem:[%s117] sm:$0x1]
    %v119 = vadd.f32 %v115, %v118
    %s120 = sld [smem:[#allocation5 + $0x5]]
    %s121 = scalar_lea.vmem %s2, %s120
    %v122 = vld [vmem:[%s121] sm:$0x1]
    %v123 = vadd.f32 %v119, %v122
    %vm124 = vcmask 253952
    %125 = vst.msk [vmem:[#allocation2] sm:$0x1] %vm124, %v123
    %s126 = sld [smem:[#allocation10]]
    %s127 = scalar_lea.vmem %s3, %s126
    %v128 = vld [vmem:[%s127] sm:$0x1]
    %s129 = sld [smem:[#allocation10 + $0x1]]
    %s130 = scalar_lea.vmem %s3, %s129
    %v131 = vld [vmem:[%s130] sm:$0x1]
    %v132 = vadd.f32 %v128, %v131
    %s133 = sld [smem:[#allocation10 + $0x2]]
    %s134 = scalar_lea.vmem %s3, %s133
    %v135 = vld [vmem:[%s134] sm:$0x1]
    %v136 = vadd.f32 %v132, %v135
    %s137 = sld [smem:[#allocation10 + $0x3]]
    %s138 = scalar_lea.vmem %s3, %s137
    %v139 = vld [vmem:[%s138] sm:$0x1]
    %v140 = vadd.f32 %v136, %v139
    %141 = vst.msk [vmem:[#allocation3] sm:$0x1] %vm124, %v140
    %s142 = sld [smem:[#allocation5 + $0x80]]
    %s143 = scalar_lea.vmem %s2, %s142
    %v144 = vld [vmem:[%s143] sm:$0x1]
    %s145 = sld [smem:[#allocation5 + $0x81]]
    %s146 = scalar_lea.vmem %s2, %s145
    %v147 = vld [vmem:[%s146] sm:$0x1]
    %v148 = vadd.f32 %v144, %v147
    %s149 = sld [smem:[#allocation5 + $0x82]]
    %s150 = scalar_lea.vmem %s2, %s149
    %v151 = vld [vmem:[%s150] sm:$0x1]
    %v152 = vadd.f32 %v148, %v151
    %s153 = sld [smem:[#allocation5 + $0x83]]
    %s154 = scalar_lea.vmem %s2, %s153
    %v155 = vld [vmem:[%s154] sm:$0x1]
    %v156 = vadd.f32 %v152, %v155
    %s157 = sld [smem:[#allocation5 + $0x84]]
    %s158 = scalar_lea.vmem %s2, %s157
    %v159 = vld [vmem:[%s158] sm:$0x1]
    %v160 = vadd.f32 %v156, %v159
    %s161 = sld [smem:[#allocation5 + $0x85]]
    %s162 = scalar_lea.vmem %s2, %s161
    %v163 = vld [vmem:[%s162] sm:$0x1]
    %v164 = vadd.f32 %v160, %v163
    %165 = vst.msk [vmem:[#allocation2 + $0x1] sm:$0x1] %vm124, %v164
    %s166 = sld [smem:[#allocation10 + $0x80]]
    %s167 = scalar_lea.vmem %s3, %s166
    %v168 = vld [vmem:[%s167] sm:$0x1]
    %s169 = sld [smem:[#allocation10 + $0x81]]
    %s170 = scalar_lea.vmem %s3, %s169
    %v171 = vld [vmem:[%s170] sm:$0x1]
    %v172 = vadd.f32 %v168, %v171
    %s173 = sld [smem:[#allocation10 + $0x82]]
    %s174 = scalar_lea.vmem %s3, %s173
    %v175 = vld [vmem:[%s174] sm:$0x1]
    %v176 = vadd.f32 %v172, %v175
    %s177 = sld [smem:[#allocation10 + $0x83]]
    %s178 = scalar_lea.vmem %s3, %s177
    %v179 = vld [vmem:[%s178] sm:$0x1]
    %v180 = vadd.f32 %v176, %v179
    %181 = vst.msk [vmem:[#allocation3 + $0x1] sm:$0x1] %vm124, %v180
    %s182 = sld [smem:[#allocation5 + $0x100]]
    %s183 = scalar_lea.vmem %s2, %s182
    %v184 = vld [vmem:[%s183] sm:$0x1]
    %s185 = sld [smem:[#allocation5 + $0x101]]
    %s186 = scalar_lea.vmem %s2, %s185
    %v187 = vld [vmem:[%s186] sm:$0x1]
    %v188 = vadd.f32 %v184, %v187
    %s189 = sld [smem:[#allocation5 + $0x102]]
    %s190 = scalar_lea.vmem %s2, %s189
    %v191 = vld [vmem:[%s190] sm:$0x1]
    %v192 = vadd.f32 %v188, %v191
    %s193 = sld [smem:[#allocation5 + $0x103]]
    %s194 = scalar_lea.vmem %s2, %s193
    %v195 = vld [vmem:[%s194] sm:$0x1]
    %v196 = vadd.f32 %v192, %v195
    %s197 = sld [smem:[#allocation5 + $0x104]]
    %s198 = scalar_lea.vmem %s2, %s197
    %v199 = vld [vmem:[%s198] sm:$0x1]
    %v200 = vadd.f32 %v196, %v199
    %s201 = sld [smem:[#allocation5 + $0x105]]
    %s202 = scalar_lea.vmem %s2, %s201
    %v203 = vld [vmem:[%s202] sm:$0x1]
    %v204 = vadd.f32 %v200, %v203
    %205 = vst.msk [vmem:[#allocation2 + $0x2] sm:$0x1] %vm124, %v204
    %s206 = sld [smem:[#allocation10 + $0x100]]
    %s207 = scalar_lea.vmem %s3, %s206
    %v208 = vld [vmem:[%s207] sm:$0x1]
    %s209 = sld [smem:[#allocation10 + $0x101]]
    %s210 = scalar_lea.vmem %s3, %s209
    %v211 = vld [vmem:[%s210] sm:$0x1]
    %v212 = vadd.f32 %v208, %v211
    %s213 = sld [smem:[#allocation10 + $0x102]]
    %s214 = scalar_lea.vmem %s3, %s213
    %v215 = vld [vmem:[%s214] sm:$0x1]
    %v216 = vadd.f32 %v212, %v215
    %s217 = sld [smem:[#allocation10 + $0x103]]
    %s218 = scalar_lea.vmem %s3, %s217
    %v219 = vld [vmem:[%s218] sm:$0x1]
    %v220 = vadd.f32 %v216, %v219
    %221 = vst.msk [vmem:[#allocation3 + $0x2] sm:$0x1] %vm124, %v220
    %s222 = sld [smem:[#allocation5 + $0x180]]
    %s223 = scalar_lea.vmem %s2, %s222
    %v224 = vld [vmem:[%s223] sm:$0x1]
    %s225 = sld [smem:[#allocation5 + $0x181]]
    %s226 = scalar_lea.vmem %s2, %s225
    %v227 = vld [vmem:[%s226] sm:$0x1]
    %v228 = vadd.f32 %v224, %v227
    %s229 = sld [smem:[#allocation5 + $0x182]]
    %s230 = scalar_lea.vmem %s2, %s229
    %v231 = vld [vmem:[%s230] sm:$0x1]
    %v232 = vadd.f32 %v228, %v231
    %s233 = sld [smem:[#allocation5 + $0x183]]
    %s234 = scalar_lea.vmem %s2, %s233
    %v235 = vld [vmem:[%s234] sm:$0x1]
    %v236 = vadd.f32 %v232, %v235
    %s237 = sld [smem:[#allocation5 + $0x184]]
    %s238 = scalar_lea.vmem %s2, %s237
    %v239 = vld [vmem:[%s238] sm:$0x1]
    %v240 = vadd.f32 %v236, %v239
    %s241 = sld [smem:[#allocation5 + $0x185]]
    %s242 = scalar_lea.vmem %s2, %s241
    %v243 = vld [vmem:[%s242] sm:$0x1]
    %v244 = vadd.f32 %v240, %v243
    %245 = vst.msk [vmem:[#allocation2 + $0x3] sm:$0x1] %vm124, %v244
    %s246 = sld [smem:[#allocation10 + $0x180]]
    %s247 = scalar_lea.vmem %s3, %s246
    %v248 = vld [vmem:[%s247] sm:$0x1]
    %s249 = sld [smem:[#allocation10 + $0x181]]
    %s250 = scalar_lea.vmem %s3, %s249
    %v251 = vld [vmem:[%s250] sm:$0x1]
    %v252 = vadd.f32 %v248, %v251
    %s253 = sld [smem:[#allocation10 + $0x182]]
    %s254 = scalar_lea.vmem %s3, %s253
    %v255 = vld [vmem:[%s254] sm:$0x1]
    %v256 = vadd.f32 %v252, %v255
    %s257 = sld [smem:[#allocation10 + $0x183]]
    %s258 = scalar_lea.vmem %s3, %s257
    %v259 = vld [vmem:[%s258] sm:$0x1]
    %v260 = vadd.f32 %v256, %v259
    %261 = vst.msk [vmem:[#allocation3 + $0x3] sm:$0x1] %vm124, %v260
    %s262 = sld [smem:[#allocation5 + $0x200]]
    %s263 = scalar_lea.vmem %s2, %s262
    %v264 = vld [vmem:[%s263] sm:$0x1]
    %s265 = sld [smem:[#allocation5 + $0x201]]
    %s266 = scalar_lea.vmem %s2, %s265
    %v267 = vld [vmem:[%s266] sm:$0x1]
    %v268 = vadd.f32 %v264, %v267
    %s269 = sld [smem:[#allocation5 + $0x202]]
    %s270 = scalar_lea.vmem %s2, %s269
    %v271 = vld [vmem:[%s270] sm:$0x1]
    %v272 = vadd.f32 %v268, %v271
    %s273 = sld [smem:[#allocation5 + $0x203]]
    %s274 = scalar_lea.vmem %s2, %s273
    %v275 = vld [vmem:[%s274] sm:$0x1]
    %v276 = vadd.f32 %v272, %v275
    %s277 = sld [smem:[#allocation5 + $0x204]]
    %s278 = scalar_lea.vmem %s2, %s277
    %v279 = vld [vmem:[%s278] sm:$0x1]
    %v280 = vadd.f32 %v276, %v279
    %s281 = sld [smem:[#allocation5 + $0x205]]
    %s282 = scalar_lea.vmem %s2, %s281
    %v283 = vld [vmem:[%s282] sm:$0x1]
    %v284 = vadd.f32 %v280, %v283
    %285 = vst.msk [vmem:[#allocation2 + $0x4] sm:$0x1] %vm124, %v284
    %s286 = sld [smem:[#allocation10 + $0x200]]
    %s287 = scalar_lea.vmem %s3, %s286
    %v288 = vld [vmem:[%s287] sm:$0x1]
    %s289 = sld [smem:[#allocation10 + $0x201]]
    %s290 = scalar_lea.vmem %s3, %s289
    %v291 = vld [vmem:[%s290] sm:$0x1]
    %v292 = vadd.f32 %v288, %v291
    %s293 = sld [smem:[#allocation10 + $0x202]]
    %s294 = scalar_lea.vmem %s3, %s293
    %v295 = vld [vmem:[%s294] sm:$0x1]
    %v296 = vadd.f32 %v292, %v295
    %s297 = sld [smem:[#allocation10 + $0x203]]
    %s298 = scalar_lea.vmem %s3, %s297
    %v299 = vld [vmem:[%s298] sm:$0x1]
    %v300 = vadd.f32 %v296, %v299
    %301 = vst.msk [vmem:[#allocation3 + $0x4] sm:$0x1] %vm124, %v300
    %v302 = vld [vmem:[#allocation2] sm:$0x1f]
    %v303 = vld [vmem:[#allocation11] sm:$0xff]
    %v304 = vld [vmem:[#allocation11 + $0x8] sm:$0xff]
    %v305 = vld [vmem:[#allocation11 + $0x10] sm:$0xff]
    %v306 = vld [vmem:[#allocation11 + $0x18] sm:$0xff]
    %v307 = vld [vmem:[#allocation11 + $0x20] sm:$0xff]
    %v308 = vld [vmem:[#allocation11 + $0x28] sm:$0xff]
    %v309 = vld [vmem:[#allocation11 + $0x30] sm:$0xff]
    %v310 = vld [vmem:[#allocation11 + $0x38] sm:$0xff]
    %v311 = vld [vmem:[#allocation11 + $0x40] sm:$0xff]
    %v312 = vld [vmem:[#allocation11 + $0x48] sm:$0xff]
    %v313 = vld [vmem:[#allocation11 + $0x50] sm:$0xff]
    %v314 = vld [vmem:[#allocation11 + $0x58] sm:$0xff]
    %v315 = vld [vmem:[#allocation3] sm:$0x1f]
    %v316 = vld [vmem:[#allocation12] sm:$0xff]
    %v317 = vld [vmem:[#allocation12 + $0x8] sm:$0xff]
    %v318 = vld [vmem:[#allocation12 + $0x10] sm:$0xff]
    %v319 = vld [vmem:[#allocation12 + $0x18] sm:$0xff]
    %v320 = vld [vmem:[#allocation12 + $0x20] sm:$0xff]
    %v321 = vld [vmem:[#allocation12 + $0x28] sm:$0xff]
    %v322 = vld [vmem:[#allocation12 + $0x30] sm:$0xff]
    %v323 = vld [vmem:[#allocation12 + $0x38] sm:$0xff]
    %v324 = vld [vmem:[#allocation12 + $0x40] sm:$0xff]
    %v325 = vld [vmem:[#allocation12 + $0x48] sm:$0xff]
    %v326 = vld [vmem:[#allocation12 + $0x50] sm:$0xff]
    %v327 = vld [vmem:[#allocation12 + $0x58] sm:$0xff]
    %vm328 = vcmask 261120
    %v330 = vsel %vm328, %v315, 0
    %332 = vmatprep.subr.mxu0 %v317
    %333 = vmatpush1.msra.mxu0 %v316
    %334 = vmatprep.subr.mxu0 %v320
    %335 = vmatpush1.msra.mxu0 %v319
    %336 = vmatprep.subr.mxu0 %v323
    %337 = vmatpush1.msra.mxu0 %v322
    %338 = vmatprep.subr.mxu0 %v326
    %339 = vmatpush1.msra.mxu0 %v325
    %340 = vmatprep.subr.mxu0 0.0
    %341 = vmatpush1.msra.mxu0 0.0
    %342 = vmatprep.subr.mxu0 0.0
    %343 = vmatpush1.msra.mxu0 0.0
    %344 = vmatprep.subr.mxu0 0.0
    %345 = vmatpush1.msra.mxu0 0.0
    %346 = vmatprep.subr.mxu0 0.0
    %347 = vmatpush1.msra.mxu0 0.0
    %348 = vmatprep.subr.mxu0 0.0
    %349 = vmatpush1.msra.mxu0 0.0
    %350 = vmatprep.subr.mxu0 0.0
    %351 = vmatpush1.msra.mxu0 0.0
    %352 = vmatprep.subr.mxu0 0.0
    %353 = vmatpush1.msra.mxu0 0.0
    %354 = vmatprep.subr.mxu0 0.0
    %355 = vmatpush1.msra.mxu0 0.0
    %356 = vmatprep.subr.mxu0 0.0
    %357 = vmatpush1.msra.mxu0 0.0
    %358 = vmatprep.subr.mxu0 0.0
    %359 = vmatpush1.msra.mxu0 0.0
    %360 = vmatprep.subr.mxu0 0.0
    %361 = vmatpush1.msra.mxu0 0.0
    %362 = vmatprep.subr.mxu0 0.0
    %363 = vmatpush1.msra.mxu0 0.0
    %364 = vmatprep.subr.mxu0 0.0
    %365 = vmatpush1.msra.mxu0 0.0
    %366 = vmatprep.subr.mxu0 0.0
    %367 = vmatpush1.msra.mxu0 0.0
    %368 = vmatprep.subr.mxu0 0.0
    %369 = vmatpush1.msra.mxu0 0.0
    %370 = vmatprep.subr.mxu0 0.0
    %371 = vmatpush1.msra.mxu0 0.0
    %372 = vmatprep.subr.mxu0 0.0
    %373 = vmatpush1.msra.mxu0 0.0
    %374 = vmatprep.subr.mxu0 0.0
    %375 = vmatpush1.msra.mxu0 0.0
    %376 = vmatprep.subr.mxu0 0.0
    %377 = vmatpush1.msra.mxu0 0.0
    %378 = vmatprep.subr.mxu0 0.0
    %379 = vmatpush1.msra.mxu0 0.0
    %380 = vmatprep.subr.mxu0 0.0
    %381 = vmatpush1.msra.mxu0 0.0
    %382 = vmatprep.subr.mxu0 0.0
    %383 = vmatpush1.msra.mxu0 0.0
    %384 = vmatprep.subr.mxu0 0.0
    %385 = vmatpush1.msra.mxu0 0.0
    %386 = vmatprep.subr.mxu0 0.0
    %387 = vmatpush1.msra.mxu0 0.0
    %388 = vmatprep.subr.mxu0 0.0
    %389 = vmatpush1.msra.mxu0 0.0
    %390 = vmatprep.subr.mxu0 0.0
    %391 = vmatpush1.msra.mxu0 0.0
    %392 = vmatprep.subr.mxu0 0.0
    %393 = vmatpush1.msra.mxu0 0.0
    %394 = vmatprep.subr.mxu0 0.0
    %395 = vmatpush1.msra.mxu0 0.0
    %396 = vmatprep.mubr.f32.mxu0 0.0
    %397 = vmatmul.mubr.f32.gmra.mrb[0].mxu0 %v330
    %v398 = vpop.f32.mrb[0].mxu0
    %v399 = vadd.f32 0.0, %v398
    %v400 = vpop.f32.mrb[0].mxu0
    %v401 = vadd.f32 0.0, %v400
    %402 = vdwg.mxu0
    %403 = vmatprep.subr.mxu0 0.0
    %404 = vmatpush1.msra.mxu0 %v318
    %405 = vmatprep.subr.mxu0 0.0
    %406 = vmatpush1.msra.mxu0 %v321
    %407 = vmatprep.subr.mxu0 0.0
    %408 = vmatpush1.msra.mxu0 %v324
    %409 = vmatprep.subr.mxu0 0.0
    %410 = vmatpush1.msra.mxu0 %v327
    %411 = vmatprep.subr.mxu0 0.0
    %412 = vmatpush1.msra.mxu0 0.0
    %413 = vmatprep.subr.mxu0 0.0
    %414 = vmatpush1.msra.mxu0 0.0
    %415 = vmatprep.subr.mxu0 0.0
    %416 = vmatpush1.msra.mxu0 0.0
    %417 = vmatprep.subr.mxu0 0.0
    %418 = vmatpush1.msra.mxu0 0.0
    %419 = vmatprep.subr.mxu0 0.0
    %420 = vmatpush1.msra.mxu0 0.0
    %421 = vmatprep.subr.mxu0 0.0
    %422 = vmatpush1.msra.mxu0 0.0
    %423 = vmatprep.subr.mxu0 0.0
    %424 = vmatpush1.msra.mxu0 0.0
    %425 = vmatprep.subr.mxu0 0.0
    %426 = vmatpush1.msra.mxu0 0.0
    %427 = vmatprep.subr.mxu0 0.0
    %428 = vmatpush1.msra.mxu0 0.0
    %429 = vmatprep.subr.mxu0 0.0
    %430 = vmatpush1.msra.mxu0 0.0
    %431 = vmatprep.subr.mxu0 0.0
    %432 = vmatpush1.msra.mxu0 0.0
    %433 = vmatprep.subr.mxu0 0.0
    %434 = vmatpush1.msra.mxu0 0.0
    %435 = vmatprep.subr.mxu0 0.0
    %436 = vmatpush1.msra.mxu0 0.0
    %437 = vmatprep.subr.mxu0 0.0
    %438 = vmatpush1.msra.mxu0 0.0
    %439 = vmatprep.subr.mxu0 0.0
    %440 = vmatpush1.msra.mxu0 0.0
    %441 = vmatprep.subr.mxu0 0.0
    %442 = vmatpush1.msra.mxu0 0.0
    %443 = vmatprep.subr.mxu0 0.0
    %444 = vmatpush1.msra.mxu0 0.0
    %445 = vmatprep.subr.mxu0 0.0
    %446 = vmatpush1.msra.mxu0 0.0
    %447 = vmatprep.subr.mxu0 0.0
    %448 = vmatpush1.msra.mxu0 0.0
    %449 = vmatprep.subr.mxu0 0.0
    %450 = vmatpush1.msra.mxu0 0.0
    %451 = vmatprep.subr.mxu0 0.0
    %452 = vmatpush1.msra.mxu0 0.0
    %453 = vmatprep.subr.mxu0 0.0
    %454 = vmatpush1.msra.mxu0 0.0
    %455 = vmatprep.subr.mxu0 0.0
    %456 = vmatpush1.msra.mxu0 0.0
    %457 = vmatprep.subr.mxu0 0.0
    %458 = vmatpush1.msra.mxu0 0.0
    %459 = vmatprep.subr.mxu0 0.0
    %460 = vmatpush1.msra.mxu0 0.0
    %461 = vmatprep.subr.mxu0 0.0
    %462 = vmatpush1.msra.mxu0 0.0
    %463 = vmatprep.subr.mxu0 0.0
    %464 = vmatpush1.msra.mxu0 0.0
    %465 = vmatprep.subr.mxu0 0.0
    %466 = vmatpush1.msra.mxu0 0.0
    %467 = vmatprep.mubr.f32.mxu0 0.0
    %468 = vmatmul.mubr.f32.gmra.mrb[0].mxu0 %v330
    %v469 = vpop.f32.mrb[0].mxu0
    %v470 = vadd.f32 0.0, %v469
    %v471 = vpop.f32.mrb[0].mxu0
    %472 = vdwg.mxu0
    %v474 = vsel %vm328, %v302, 0
    %476 = vmatprep.subr.mxu0 %v304
    %477 = vmatpush1.msra.mxu0 %v303
    %478 = vmatprep.subr.mxu0 %v307
    %479 = vmatpush1.msra.mxu0 %v306
    %480 = vmatprep.subr.mxu0 %v310
    %481 = vmatpush1.msra.mxu0 %v309
    %482 = vmatprep.subr.mxu0 %v313
    %483 = vmatpush1.msra.mxu0 %v312
    %484 = vmatprep.subr.mxu0 0.0
    %485 = vmatpush1.msra.mxu0 0.0
    %486 = vmatprep.subr.mxu0 0.0
    %487 = vmatpush1.msra.mxu0 0.0
    %488 = vmatprep.subr.mxu0 0.0
    %489 = vmatpush1.msra.mxu0 0.0
    %490 = vmatprep.subr.mxu0 0.0
    %491 = vmatpush1.msra.mxu0 0.0
    %492 = vmatprep.subr.mxu0 0.0
    %493 = vmatpush1.msra.mxu0 0.0
    %494 = vmatprep.subr.mxu0 0.0
    %495 = vmatpush1.msra.mxu0 0.0
    %496 = vmatprep.subr.mxu0 0.0
    %497 = vmatpush1.msra.mxu0 0.0
    %498 = vmatprep.subr.mxu0 0.0
    %499 = vmatpush1.msra.mxu0 0.0
    %500 = vmatprep.subr.mxu0 0.0
    %501 = vmatpush1.msra.mxu0 0.0
    %502 = vmatprep.subr.mxu0 0.0
    %503 = vmatpush1.msra.mxu0 0.0
    %504 = vmatprep.subr.mxu0 0.0
    %505 = vmatpush1.msra.mxu0 0.0
    %506 = vmatprep.subr.mxu0 0.0
    %507 = vmatpush1.msra.mxu0 0.0
    %508 = vmatprep.subr.mxu0 0.0
    %509 = vmatpush1.msra.mxu0 0.0
    %510 = vmatprep.subr.mxu0 0.0
    %511 = vmatpush1.msra.mxu0 0.0
    %512 = vmatprep.subr.mxu0 0.0
    %513 = vmatpush1.msra.mxu0 0.0
    %514 = vmatprep.subr.mxu0 0.0
    %515 = vmatpush1.msra.mxu0 0.0
    %516 = vmatprep.subr.mxu0 0.0
    %517 = vmatpush1.msra.mxu0 0.0
    %518 = vmatprep.subr.mxu0 0.0
    %519 = vmatpush1.msra.mxu0 0.0
    %520 = vmatprep.subr.mxu0 0.0
    %521 = vmatpush1.msra.mxu0 0.0
    %522 = vmatprep.subr.mxu0 0.0
    %523 = vmatpush1.msra.mxu0 0.0
    %524 = vmatprep.subr.mxu0 0.0
    %525 = vmatpush1.msra.mxu0 0.0
    %526 = vmatprep.subr.mxu0 0.0
    %527 = vmatpush1.msra.mxu0 0.0
    %528 = vmatprep.subr.mxu0 0.0
    %529 = vmatpush1.msra.mxu0 0.0
    %530 = vmatprep.subr.mxu0 0.0
    %531 = vmatpush1.msra.mxu0 0.0
    %532 = vmatprep.subr.mxu0 0.0
    %533 = vmatpush1.msra.mxu0 0.0
    %534 = vmatprep.subr.mxu0 0.0
    %535 = vmatpush1.msra.mxu0 0.0
    %536 = vmatprep.subr.mxu0 0.0
    %537 = vmatpush1.msra.mxu0 0.0
    %538 = vmatprep.subr.mxu0 0.0
    %539 = vmatpush1.msra.mxu0 0.0
    %540 = vmatprep.mubr.f32.mxu0 0.0
    %541 = vmatmul.mubr.f32.gmra.mrb[0].mxu0 %v474
    %v542 = vpop.f32.mrb[0].mxu0
    %v543 = vadd.f32 %v399, %v542
    %v544 = vpop.f32.mrb[0].mxu0
    %v545 = vadd.f32 %v401, %v544
    %546 = vdwg.mxu0
    %547 = vmatprep.subr.mxu0 0.0
    %548 = vmatpush1.msra.mxu0 %v305
    %549 = vmatprep.subr.mxu0 0.0
    %550 = vmatpush1.msra.mxu0 %v308
    %551 = vmatprep.subr.mxu0 0.0
    %552 = vmatpush1.msra.mxu0 %v311
    %553 = vmatprep.subr.mxu0 0.0
    %554 = vmatpush1.msra.mxu0 %v314
    %555 = vmatprep.subr.mxu0 0.0
    %556 = vmatpush1.msra.mxu0 0.0
    %557 = vmatprep.subr.mxu0 0.0
    %558 = vmatpush1.msra.mxu0 0.0
    %559 = vmatprep.subr.mxu0 0.0
    %560 = vmatpush1.msra.mxu0 0.0
    %561 = vmatprep.subr.mxu0 0.0
    %562 = vmatpush1.msra.mxu0 0.0
    %563 = vmatprep.subr.mxu0 0.0
    %564 = vmatpush1.msra.mxu0 0.0
    %565 = vmatprep.subr.mxu0 0.0
    %566 = vmatpush1.msra.mxu0 0.0
    %567 = vmatprep.subr.mxu0 0.0
    %568 = vmatpush1.msra.mxu0 0.0
    %569 = vmatprep.subr.mxu0 0.0
    %570 = vmatpush1.msra.mxu0 0.0
    %571 = vmatprep.subr.mxu0 0.0
    %572 = vmatpush1.msra.mxu0 0.0
    %573 = vmatprep.subr.mxu0 0.0
    %574 = vmatpush1.msra.mxu0 0.0
    %575 = vmatprep.subr.mxu0 0.0
    %576 = vmatpush1.msra.mxu0 0.0
    %577 = vmatprep.subr.mxu0 0.0
    %578 = vmatpush1.msra.mxu0 0.0
    %579 = vmatprep.subr.mxu0 0.0
    %580 = vmatpush1.msra.mxu0 0.0
    %581 = vmatprep.subr.mxu0 0.0
    %582 = vmatpush1.msra.mxu0 0.0
    %583 = vmatprep.subr.mxu0 0.0
    %584 = vmatpush1.msra.mxu0 0.0
    %585 = vmatprep.subr.mxu0 0.0
    %586 = vmatpush1.msra.mxu0 0.0
    %587 = vmatprep.subr.mxu0 0.0
    %588 = vmatpush1.msra.mxu0 0.0
    %589 = vmatprep.subr.mxu0 0.0
    %590 = vmatpush1.msra.mxu0 0.0
    %591 = vmatprep.subr.mxu0 0.0
    %592 = vmatpush1.msra.mxu0 0.0
    %593 = vmatprep.subr.mxu0 0.0
    %594 = vmatpush1.msra.mxu0 0.0
    %595 = vmatprep.subr.mxu0 0.0
    %596 = vmatpush1.msra.mxu0 0.0
    %597 = vmatprep.subr.mxu0 0.0
    %598 = vmatpush1.msra.mxu0 0.0
    %599 = vmatprep.subr.mxu0 0.0
    %600 = vmatpush1.msra.mxu0 0.0
    %601 = vmatprep.subr.mxu0 0.0
    %602 = vmatpush1.msra.mxu0 0.0
    %603 = vmatprep.subr.mxu0 0.0
    %604 = vmatpush1.msra.mxu0 0.0
    %605 = vmatprep.subr.mxu0 0.0
    %606 = vmatpush1.msra.mxu0 0.0
    %607 = vmatprep.subr.mxu0 0.0
    %608 = vmatpush1.msra.mxu0 0.0
    %609 = vmatprep.subr.mxu0 0.0
    %610 = vmatpush1.msra.mxu0 0.0
    %611 = vmatprep.mubr.f32.mxu0 0.0
    %612 = vmatmul.mubr.f32.gmra.mrb[0].mxu0 %v474
    %v613 = vpop.f32.mrb[0].mxu0
    %v614 = vadd.f32 %v470, %v613
    %v615 = vpop.f32.mrb[0].mxu0
    %616 = vdwg.mxu0
    %v617 = vld [vmem:[#allocation14] sm:$0x7]
    %v619 = vlaneseq
    %v620 = vshrl.u32 %v619, 7
    %v621 = vsub.s32 0, %v620
    %v622 = vrot.slane %v617, %v621
    %v623 = vlaneseq
    %v624 = vshrl.u32 %v623, 7
    %v625 = vsub.s32 1, %v624
    %v626 = vrot.slane %v617, %v625
    %v627 = vlaneseq
    %v628 = vshrl.u32 %v627, 7
    %v629 = vsub.s32 2, %v628
    %v630 = vrot.slane %v617, %v629
    %v634 = vadd.f32 %v543, %v622
    %v635 = vadd.f32 %v545, %v626
    %v636 = vadd.f32 %v614, %v630
    %637 = vst [vmem:[#allocation4] sm:$0x1f] %v634
    %638 = vst [vmem:[#allocation4 + $0x8] sm:$0x1f] %v635
    %639 = vst [vmem:[#allocation4 + $0x10] sm:$0x1f] %v636
    %v640 = vld [vmem:[%s6] sm:$0xff]
    %v641 = vld [vmem:[%s6 + $0x8] sm:$0xff]
    %v642 = vld [vmem:[%s6 + $0x10] sm:$0xff]
    %v643 = vld [vmem:[%s6 + $0x18] sm:$0xff]
    %v644 = vld [vmem:[%s6 + $0x20] sm:$0xff]
    %v645 = vld [vmem:[%s6 + $0x28] sm:$0xff]
    %v646 = vld [vmem:[%s6 + $0x30] sm:$0xff]
    %v647 = vld [vmem:[%s6 + $0x38] sm:$0xff]
    %v648 = vld [vmem:[%s6 + $0x40] sm:$0xff]
    %v649 = vld [vmem:[%s6 + $0x48] sm:$0xff]
    %v650 = vld [vmem:[%s6 + $0x50] sm:$0xff]
    %v651 = vld [vmem:[%s6 + $0x58] sm:$0xff]
    %v652 = vld [vmem:[%s6 + $0x60] sm:$0xff]
    %v653 = vld [vmem:[%s6 + $0x68] sm:$0xff]
    %v654 = vld [vmem:[%s6 + $0x70] sm:$0xff]
    %v655 = vld [vmem:[%s6 + $0x78] sm:$0xff]
    %v656 = vld [vmem:[%s6 + $0x80] sm:$0xff]
    %v657 = vld [vmem:[%s6 + $0x88] sm:$0xff]
    %v658 = vld [vmem:[%s6 + $0x90] sm:$0xff]
    %v659 = vld [vmem:[%s6 + $0x98] sm:$0xff]
    %v660 = vld [vmem:[%s6 + $0xa0] sm:$0xff]
    %v661 = vld [vmem:[%s6 + $0xa8] sm:$0xff]
    %v662 = vld [vmem:[%s6 + $0xb0] sm:$0xff]
    %v663 = vld [vmem:[%s6 + $0xb8] sm:$0xff]
    %v664 = vld [vmem:[%s6 + $0xc0] sm:$0xff]
    %v665 = vld [vmem:[%s6 + $0xc8] sm:$0xff]
    %v666 = vld [vmem:[%s6 + $0xd0] sm:$0xff]
    %v667 = vld [vmem:[%s6 + $0xd8] sm:$0xff]
    %v668 = vld [vmem:[%s6 + $0xe0] sm:$0xff]
    %v669 = vld [vmem:[%s6 + $0xe8] sm:$0xff]
    %v670 = vld [vmem:[%s6 + $0xf0] sm:$0xff]
    %v671 = vld [vmem:[%s6 + $0xf8] sm:$0xff]
    %v672 = vld [vmem:[%s6 + $0x100] sm:$0xff]
    %v673 = vld [vmem:[%s6 + $0x108] sm:$0xff]
    %v674 = vld [vmem:[%s6 + $0x110] sm:$0xff]
    %v675 = vld [vmem:[%s6 + $0x118] sm:$0xff]
    %v676 = vld [vmem:[%s6 + $0x120] sm:$0xff]
    %v677 = vld [vmem:[%s6 + $0x128] sm:$0xff]
    %v678 = vld [vmem:[%s6 + $0x130] sm:$0xff]
    %v679 = vld [vmem:[%s6 + $0x138] sm:$0xff]
    %v680 = vld [vmem:[%s6 + $0x140] sm:$0xff]
    %v681 = vld [vmem:[%s6 + $0x148] sm:$0xff]
    %v682 = vld [vmem:[%s6 + $0x150] sm:$0xff]
    %v683 = vld [vmem:[%s6 + $0x158] sm:$0xff]
    %v684 = vld [vmem:[%s6 + $0x160] sm:$0xff]
    %v685 = vld [vmem:[%s6 + $0x168] sm:$0xff]
    %v686 = vld [vmem:[%s6 + $0x170] sm:$0xff]
    %v687 = vld [vmem:[%s6 + $0x178] sm:$0xff]
    %v688 = vld [vmem:[%s8] sm:$0x1]
    %v689 = vld [vmem:[#allocation4] ss:$8 sm:$0x7]
    %690 = vmatprep.subr.mxu0 %v641
    %691 = vmatpush1.msra.mxu0 %v640
    %692 = vmatprep.subr.mxu0 %v644
    %693 = vmatpush1.msra.mxu0 %v643
    %694 = vmatprep.subr.mxu0 %v647
    %695 = vmatpush1.msra.mxu0 %v646
    %696 = vmatprep.subr.mxu0 %v650
    %697 = vmatpush1.msra.mxu0 %v649
    %698 = vmatprep.subr.mxu0 %v653
    %699 = vmatpush1.msra.mxu0 %v652
    %700 = vmatprep.subr.mxu0 %v656
    %701 = vmatpush1.msra.mxu0 %v655
    %702 = vmatprep.subr.mxu0 %v659
    %703 = vmatpush1.msra.mxu0 %v658
    %704 = vmatprep.subr.mxu0 %v662
    %705 = vmatpush1.msra.mxu0 %v661
    %706 = vmatprep.subr.mxu0 %v665
    %707 = vmatpush1.msra.mxu0 %v664
    %708 = vmatprep.subr.mxu0 %v668
    %709 = vmatpush1.msra.mxu0 %v667
    %710 = vmatprep.subr.mxu0 %v671
    %711 = vmatpush1.msra.mxu0 %v670
    %712 = vmatprep.subr.mxu0 %v674
    %713 = vmatpush1.msra.mxu0 %v673
    %714 = vmatprep.subr.mxu0 %v677
    %715 = vmatpush1.msra.mxu0 %v676
    %716 = vmatprep.subr.mxu0 %v680
    %717 = vmatpush1.msra.mxu0 %v679
    %718 = vmatprep.subr.mxu0 %v683
    %719 = vmatpush1.msra.mxu0 %v682
    %720 = vmatprep.subr.mxu0 %v686
    %721 = vmatpush1.msra.mxu0 %v685
    %722 = vmatprep.subr.mxu0 0.0
    %723 = vmatpush1.msra.mxu0 0.0
    %724 = vmatprep.subr.mxu0 0.0
    %725 = vmatpush1.msra.mxu0 0.0
    %726 = vmatprep.subr.mxu0 0.0
    %727 = vmatpush1.msra.mxu0 0.0
    %728 = vmatprep.subr.mxu0 0.0
    %729 = vmatpush1.msra.mxu0 0.0
    %730 = vmatprep.subr.mxu0 0.0
    %731 = vmatpush1.msra.mxu0 0.0
    %732 = vmatprep.subr.mxu0 0.0
    %733 = vmatpush1.msra.mxu0 0.0
    %734 = vmatprep.subr.mxu0 0.0
    %735 = vmatpush1.msra.mxu0 0.0
    %736 = vmatprep.subr.mxu0 0.0
    %737 = vmatpush1.msra.mxu0 0.0
    %738 = vmatprep.subr.mxu0 0.0
    %739 = vmatpush1.msra.mxu0 0.0
    %740 = vmatprep.subr.mxu0 0.0
    %741 = vmatpush1.msra.mxu0 0.0
    %742 = vmatprep.subr.mxu0 0.0
    %743 = vmatpush1.msra.mxu0 0.0
    %744 = vmatprep.subr.mxu0 0.0
    %745 = vmatpush1.msra.mxu0 0.0
    %746 = vmatprep.subr.mxu0 0.0
    %747 = vmatpush1.msra.mxu0 0.0
    %748 = vmatprep.subr.mxu0 0.0
    %749 = vmatpush1.msra.mxu0 0.0
    %750 = vmatprep.subr.mxu0 0.0
    %751 = vmatpush1.msra.mxu0 0.0
    %752 = vmatprep.subr.mxu0 0.0
    %753 = vmatpush1.msra.mxu0 0.0
    %754 = vmatprep.mubr.f32.mxu0 0.0
    %755 = vmatmul.mubr.f32.gmra.mrb[0].mxu0 0.0
    %v756 = vpop.f32.mrb[0].mxu0
    %v757 = vadd.f32 0.0, %v756
    %v758 = vpop.f32.mrb[0].mxu0
    %v759 = vadd.f32 0.0, %v758
    %760 = vdwg.mxu0
    %761 = vmatprep.subr.mxu0 0.0
    %762 = vmatpush1.msra.mxu0 %v642
    %763 = vmatprep.subr.mxu0 0.0
    %764 = vmatpush1.msra.mxu0 %v645
    %765 = vmatprep.subr.mxu0 0.0
    %766 = vmatpush1.msra.mxu0 %v648
    %767 = vmatprep.subr.mxu0 0.0
    %768 = vmatpush1.msra.mxu0 %v651
    %769 = vmatprep.subr.mxu0 0.0
    %770 = vmatpush1.msra.mxu0 %v654
    %771 = vmatprep.subr.mxu0 0.0
    %772 = vmatpush1.msra.mxu0 %v657
    %773 = vmatprep.subr.mxu0 0.0
    %774 = vmatpush1.msra.mxu0 %v660
    %775 = vmatprep.subr.mxu0 0.0
    %776 = vmatpush1.msra.mxu0 %v663
    %777 = vmatprep.subr.mxu0 0.0
    %778 = vmatpush1.msra.mxu0 %v666
    %779 = vmatprep.subr.mxu0 0.0
    %780 = vmatpush1.msra.mxu0 %v669
    %781 = vmatprep.subr.mxu0 0.0
    %782 = vmatpush1.msra.mxu0 %v672
    %783 = vmatprep.subr.mxu0 0.0
    %784 = vmatpush1.msra.mxu0 %v675
    %785 = vmatprep.subr.mxu0 0.0
    %786 = vmatpush1.msra.mxu0 %v678
    %787 = vmatprep.subr.mxu0 0.0
    %788 = vmatpush1.msra.mxu0 %v681
    %789 = vmatprep.subr.mxu0 0.0
    %790 = vmatpush1.msra.mxu0 %v684
    %791 = vmatprep.subr.mxu0 0.0
    %792 = vmatpush1.msra.mxu0 %v687
    %793 = vmatprep.subr.mxu0 0.0
    %794 = vmatpush1.msra.mxu0 0.0
    %795 = vmatprep.subr.mxu0 0.0
    %796 = vmatpush1.msra.mxu0 0.0
    %797 = vmatprep.subr.mxu0 0.0
    %798 = vmatpush1.msra.mxu0 0.0
    %799 = vmatprep.subr.mxu0 0.0
    %800 = vmatpush1.msra.mxu0 0.0
    %801 = vmatprep.subr.mxu0 0.0
    %802 = vmatpush1.msra.mxu0 0.0
    %803 = vmatprep.subr.mxu0 0.0
    %804 = vmatpush1.msra.mxu0 0.0
    %805 = vmatprep.subr.mxu0 0.0
    %806 = vmatpush1.msra.mxu0 0.0
    %807 = vmatprep.subr.mxu0 0.0
    %808 = vmatpush1.msra.mxu0 0.0
    %809 = vmatprep.subr.mxu0 0.0
    %810 = vmatpush1.msra.mxu0 0.0
    %811 = vmatprep.subr.mxu0 0.0
    %812 = vmatpush1.msra.mxu0 0.0
    %813 = vmatprep.subr.mxu0 0.0
    %814 = vmatpush1.msra.mxu0 0.0
    %815 = vmatprep.subr.mxu0 0.0
    %816 = vmatpush1.msra.mxu0 0.0
    %817 = vmatprep.subr.mxu0 0.0
    %818 = vmatpush1.msra.mxu0 0.0
    %819 = vmatprep.subr.mxu0 0.0
    %820 = vmatpush1.msra.mxu0 0.0
    %821 = vmatprep.subr.mxu0 0.0
    %822 = vmatpush1.msra.mxu0 0.0
    %823 = vmatprep.subr.mxu0 0.0
    %824 = vmatpush1.msra.mxu0 0.0
    %825 = vmatprep.mubr.f32.mxu0 0.0
    %826 = vmatmul.mubr.f32.gmra.mrb[0].mxu0 0.0
    %v827 = vpop.f32.mrb[0].mxu0
    %v828 = vadd.f32 0.0, %v827
    %v829 = vpop.f32.mrb[0].mxu0
    %830 = vdwg.mxu0
    %v833 = vcombine.low %v757, %v759
    %v835 = vunpack.c.l.s4 1966171168
    %v836 = vunpack.c.0.s8 %v835
    %v837 = vlaneseq
    %v838 = vshrl.u32 %v837, 7
    %v839 = vsub.s32 %v836, %v838
    %v840 = vrot.slane %v833, %v839
    %v842 = vunpack.c.l.s4 1966171168
    %v843 = vunpack.c.0.s8 %v842
    %v844 = vlaneseq
    %v845 = vshrl.u32 %v844, 7
    %v846 = vsub.s32 %v843, %v845
    %v847 = vrot.slane %v840, %v846
    %v849 = vadd.f32 %v689, %v847
    %v850 = vxor.u32 %v849, 2147483648
    %v851 = vmul.f32 %v850, 1.442695
    %v852 = vpow.pop %v851
    %v853 = vadd.f32 %v852, 1.0
    %v854 = vrcp.pop %v853
    %v855 = vmul.f32 1.0, %v854
    %v856 = vadd.f32 %v828, %v688
    %v857 = vmul.f32 %v855, %v856
    %v859 = vrot.slane %v689, 2
    %v861 = vadd.f32 %v859, %v857
    %v862 = vtanh.pop %v861
    %v863 = vsub.f32 0.0, %v862
    %v865 = vrot.slane %v855, 1
    %v867 = vmul.f32 %v865, %v863
    %v868 = vadd.f32 %v862, %v867
    %s869 = scalar_lea.vmem [#allocation4], 1
    %v870 = vld [vmem:[%s869] ss:$8 sm:$0x7]
    %871 = vmatprep.subr.mxu0 %v641
    %872 = vmatpush1.msra.mxu0 %v640
    %873 = vmatprep.subr.mxu0 %v644
    %874 = vmatpush1.msra.mxu0 %v643
    %875 = vmatprep.subr.mxu0 %v647
    %876 = vmatpush1.msra.mxu0 %v646
    %877 = vmatprep.subr.mxu0 %v650
    %878 = vmatpush1.msra.mxu0 %v649
    %879 = vmatprep.subr.mxu0 %v653
    %880 = vmatpush1.msra.mxu0 %v652
    %881 = vmatprep.subr.mxu0 %v656
    %882 = vmatpush1.msra.mxu0 %v655
    %883 = vmatprep.subr.mxu0 %v659
    %884 = vmatpush1.msra.mxu0 %v658
    %885 = vmatprep.subr.mxu0 %v662
    %886 = vmatpush1.msra.mxu0 %v661
    %887 = vmatprep.subr.mxu0 %v665
    %888 = vmatpush1.msra.mxu0 %v664
    %889 = vmatprep.subr.mxu0 %v668
    %890 = vmatpush1.msra.mxu0 %v667
    %891 = vmatprep.subr.mxu0 %v671
    %892 = vmatpush1.msra.mxu0 %v670
    %893 = vmatprep.subr.mxu0 %v674
    %894 = vmatpush1.msra.mxu0 %v673
    %895 = vmatprep.subr.mxu0 %v677
    %896 = vmatpush1.msra.mxu0 %v676
    %897 = vmatprep.subr.mxu0 %v680
    %898 = vmatpush1.msra.mxu0 %v679
    %899 = vmatprep.subr.mxu0 %v683
    %900 = vmatpush1.msra.mxu0 %v682
    %901 = vmatprep.subr.mxu0 %v686
    %902 = vmatpush1.msra.mxu0 %v685
    %903 = vmatprep.subr.mxu0 0.0
    %904 = vmatpush1.msra.mxu0 0.0
    %905 = vmatprep.subr.mxu0 0.0
    %906 = vmatpush1.msra.mxu0 0.0
    %907 = vmatprep.subr.mxu0 0.0
    %908 = vmatpush1.msra.mxu0 0.0
    %909 = vmatprep.subr.mxu0 0.0
    %910 = vmatpush1.msra.mxu0 0.0
    %911 = vmatprep.subr.mxu0 0.0
    %912 = vmatpush1.msra.mxu0 0.0
    %913 = vmatprep.subr.mxu0 0.0
    %914 = vmatpush1.msra.mxu0 0.0
    %915 = vmatprep.subr.mxu0 0.0
    %916 = vmatpush1.msra.mxu0 0.0
    %917 = vmatprep.subr.mxu0 0.0
    %918 = vmatpush1.msra.mxu0 0.0
    %919 = vmatprep.subr.mxu0 0.0
    %920 = vmatpush1.msra.mxu0 0.0
    %921 = vmatprep.subr.mxu0 0.0
    %922 = vmatpush1.msra.mxu0 0.0
    %923 = vmatprep.subr.mxu0 0.0
    %924 = vmatpush1.msra.mxu0 0.0
    %925 = vmatprep.subr.mxu0 0.0
    %926 = vmatpush1.msra.mxu0 0.0
    %927 = vmatprep.subr.mxu0 0.0
    %928 = vmatpush1.msra.mxu0 0.0
    %929 = vmatprep.subr.mxu0 0.0
    %930 = vmatpush1.msra.mxu0 0.0
    %931 = vmatprep.subr.mxu0 0.0
    %932 = vmatpush1.msra.mxu0 0.0
    %933 = vmatprep.subr.mxu0 0.0
    %934 = vmatpush1.msra.mxu0 0.0
    %935 = vmatprep.mubr.f32.mxu0 0.0
    %936 = vmatmul.mubr.f32.gmra.mrb[0].mxu0 %v868
    %v937 = vpop.f32.mrb[0].mxu0
    %v938 = vadd.f32 0.0, %v937
    %v939 = vpop.f32.mrb[0].mxu0
    %v940 = vadd.f32 0.0, %v939
    %941 = vdwg.mxu0
    %942 = vmatprep.subr.mxu0 0.0
    %943 = vmatpush1.msra.mxu0 %v642
    %944 = vmatprep.subr.mxu0 0.0
    %945 = vmatpush1.msra.mxu0 %v645
    %946 = vmatprep.subr.mxu0 0.0
    %947 = vmatpush1.msra.mxu0 %v648
    %948 = vmatprep.subr.mxu0 0.0
    %949 = vmatpush1.msra.mxu0 %v651
    %950 = vmatprep.subr.mxu0 0.0
    %951 = vmatpush1.msra.mxu0 %v654
    %952 = vmatprep.subr.mxu0 0.0
    %953 = vmatpush1.msra.mxu0 %v657
    %954 = vmatprep.subr.mxu0 0.0
    %955 = vmatpush1.msra.mxu0 %v660
    %956 = vmatprep.subr.mxu0 0.0
    %957 = vmatpush1.msra.mxu0 %v663
    %958 = vmatprep.subr.mxu0 0.0
    %959 = vmatpush1.msra.mxu0 %v666
    %960 = vmatprep.subr.mxu0 0.0
    %961 = vmatpush1.msra.mxu0 %v669
    %962 = vmatprep.subr.mxu0 0.0
    %963 = vmatpush1.msra.mxu0 %v672
    %964 = vmatprep.subr.mxu0 0.0
    %965 = vmatpush1.msra.mxu0 %v675
    %966 = vmatprep.subr.mxu0 0.0
    %967 = vmatpush1.msra.mxu0 %v678
    %968 = vmatprep.subr.mxu0 0.0
    %969 = vmatpush1.msra.mxu0 %v681
    %970 = vmatprep.subr.mxu0 0.0
    %971 = vmatpush1.msra.mxu0 %v684
    %972 = vmatprep.subr.mxu0 0.0
    %973 = vmatpush1.msra.mxu0 %v687
    %974 = vmatprep.subr.mxu0 0.0
    %975 = vmatpush1.msra.mxu0 0.0
    %976 = vmatprep.subr.mxu0 0.0
    %977 = vmatpush1.msra.mxu0 0.0
    %978 = vmatprep.subr.mxu0 0.0
    %979 = vmatpush1.msra.mxu0 0.0
    %980 = vmatprep.subr.mxu0 0.0
    %981 = vmatpush1.msra.mxu0 0.0
    %982 = vmatprep.subr.mxu0 0.0
    %983 = vmatpush1.msra.mxu0 0.0
    %984 = vmatprep.subr.mxu0 0.0
    %985 = vmatpush1.msra.mxu0 0.0
    %986 = vmatprep.subr.mxu0 0.0
    %987 = vmatpush1.msra.mxu0 0.0
    %988 = vmatprep.subr.mxu0 0.0
    %989 = vmatpush1.msra.mxu0 0.0
    %990 = vmatprep.subr.mxu0 0.0
    %991 = vmatpush1.msra.mxu0 0.0
    %992 = vmatprep.subr.mxu0 0.0
    %993 = vmatpush1.msra.mxu0 0.0
    %994 = vmatprep.subr.mxu0 0.0
    %995 = vmatpush1.msra.mxu0 0.0
    %996 = vmatprep.subr.mxu0 0.0
    %997 = vmatpush1.msra.mxu0 0.0
    %998 = vmatprep.subr.mxu0 0.0
    %999 = vmatpush1.msra.mxu0 0.0
    %1000 = vmatprep.subr.mxu0 0.0
    %1001 = vmatpush1.msra.mxu0 0.0
    %1002 = vmatprep.subr.mxu0 0.0
    %1003 = vmatpush1.msra.mxu0 0.0
    %1004 = vmatprep.subr.mxu0 0.0
    %1005 = vmatpush1.msra.mxu0 0.0
    %1006 = vmatprep.mubr.f32.mxu0 0.0
    %1007 = vmatmul.mubr.f32.gmra.mrb[0].mxu0 %v868
    %v1008 = vpop.f32.mrb[0].mxu0
    %v1009 = vadd.f32 0.0, %v1008
    %v1010 = vpop.f32.mrb[0].mxu0
    %1011 = vdwg.mxu0
    %v1014 = vcombine.low %v938, %v940
    %v1016 = vunpack.c.l.s4 1966171168
    %v1017 = vunpack.c.0.s8 %v1016
    %v1018 = vlaneseq
    %v1019 = vshrl.u32 %v1018, 7
    %v1020 = vsub.s32 %v1017, %v1019
    %v1021 = vrot.slane %v1014, %v1020
    %v1023 = vunpack.c.l.s4 1966171168
    %v1024 = vunpack.c.0.s8 %v1023
    %v1025 = vlaneseq
    %v1026 = vshrl.u32 %v1025, 7
    %v1027 = vsub.s32 %v1024, %v1026
    %v1028 = vrot.slane %v1021, %v1027
    %v1030 = vadd.f32 %v870, %v1028
    %v1031 = vxor.u32 %v1030, 2147483648
    %v1032 = vmul.f32 %v1031, 1.442695
    %v1033 = vpow.pop %v1032
    %v1034 = vadd.f32 %v1033, 1.0
    %v1035 = vrcp.pop %v1034
    %v1036 = vmul.f32 1.0, %v1035
    %v1037 = vadd.f32 %v1009, %v688
    %v1038 = vmul.f32 %v1036, %v1037
    %v1040 = vrot.slane %v870, 2
    %v1042 = vadd.f32 %v1040, %v1038
    %v1043 = vtanh.pop %v1042
    %v1044 = vsub.f32 %v868, %v1043
    %v1046 = vrot.slane %v1036, 1
    %v1048 = vmul.f32 %v1046, %v1044
    %v1049 = vadd.f32 %v1043, %v1048
    %s1050 = scalar_lea.vmem [#allocation4], 2
    %v1051 = vld [vmem:[%s1050] ss:$8 sm:$0x7]
    %1052 = vmatprep.subr.mxu0 %v641
    %1053 = vmatpush1.msra.mxu0 %v640
    %1054 = vmatprep.subr.mxu0 %v644
    %1055 = vmatpush1.msra.mxu0 %v643
    %1056 = vmatprep.subr.mxu0 %v647
    %1057 = vmatpush1.msra.mxu0 %v646
    %1058 = vmatprep.subr.mxu0 %v650
    %1059 = vmatpush1.msra.mxu0 %v649
    %1060 = vmatprep.subr.mxu0 %v653
    %1061 = vmatpush1.msra.mxu0 %v652
    %1062 = vmatprep.subr.mxu0 %v656
    %1063 = vmatpush1.msra.mxu0 %v655
    %1064 = vmatprep.subr.mxu0 %v659
    %1065 = vmatpush1.msra.mxu0 %v658
    %1066 = vmatprep.subr.mxu0 %v662
    %1067 = vmatpush1.msra.mxu0 %v661
    %1068 = vmatprep.subr.mxu0 %v665
    %1069 = vmatpush1.msra.mxu0 %v664
    %1070 = vmatprep.subr.mxu0 %v668
    %1071 = vmatpush1.msra.mxu0 %v667
    %1072 = vmatprep.subr.mxu0 %v671
    %1073 = vmatpush1.msra.mxu0 %v670
    %1074 = vmatprep.subr.mxu0 %v674
    %1075 = vmatpush1.msra.mxu0 %v673
    %1076 = vmatprep.subr.mxu0 %v677
    %1077 = vmatpush1.msra.mxu0 %v676
    %1078 = vmatprep.subr.mxu0 %v680
    %1079 = vmatpush1.msra.mxu0 %v679
    %1080 = vmatprep.subr.mxu0 %v683
    %1081 = vmatpush1.msra.mxu0 %v682
    %1082 = vmatprep.subr.mxu0 %v686
    %1083 = vmatpush1.msra.mxu0 %v685
    %1084 = vmatprep.subr.mxu0 0.0
    %1085 = vmatpush1.msra.mxu0 0.0
    %1086 = vmatprep.subr.mxu0 0.0
    %1087 = vmatpush1.msra.mxu0 0.0
    %1088 = vmatprep.subr.mxu0 0.0
    %1089 = vmatpush1.msra.mxu0 0.0
    %1090 = vmatprep.subr.mxu0 0.0
    %1091 = vmatpush1.msra.mxu0 0.0
    %1092 = vmatprep.subr.mxu0 0.0
    %1093 = vmatpush1.msra.mxu0 0.0
    %1094 = vmatprep.subr.mxu0 0.0
    %1095 = vmatpush1.msra.mxu0 0.0
    %1096 = vmatprep.subr.mxu0 0.0
    %1097 = vmatpush1.msra.mxu0 0.0
    %1098 = vmatprep.subr.mxu0 0.0
    %1099 = vmatpush1.msra.mxu0 0.0
    %1100 = vmatprep.subr.mxu0 0.0
    %1101 = vmatpush1.msra.mxu0 0.0
    %1102 = vmatprep.subr.mxu0 0.0
    %1103 = vmatpush1.msra.mxu0 0.0
    %1104 = vmatprep.subr.mxu0 0.0
    %1105 = vmatpush1.msra.mxu0 0.0
    %1106 = vmatprep.subr.mxu0 0.0
    %1107 = vmatpush1.msra.mxu0 0.0
    %1108 = vmatprep.subr.mxu0 0.0
    %1109 = vmatpush1.msra.mxu0 0.0
    %1110 = vmatprep.subr.mxu0 0.0
    %1111 = vmatpush1.msra.mxu0 0.0
    %1112 = vmatprep.subr.mxu0 0.0
    %1113 = vmatpush1.msra.mxu0 0.0
    %1114 = vmatprep.subr.mxu0 0.0
    %1115 = vmatpush1.msra.mxu0 0.0
    %1116 = vmatprep.mubr.f32.mxu0 0.0
    %1117 = vmatmul.mubr.f32.gmra.mrb[0].mxu0 %v1049
    %v1118 = vpop.f32.mrb[0].mxu0
    %v1119 = vadd.f32 0.0, %v1118
    %v1120 = vpop.f32.mrb[0].mxu0
    %v1121 = vadd.f32 0.0, %v1120
    %1122 = vdwg.mxu0
    %1123 = vmatprep.subr.mxu0 0.0
    %1124 = vmatpush1.msra.mxu0 %v642
    %1125 = vmatprep.subr.mxu0 0.0
    %1126 = vmatpush1.msra.mxu0 %v645
    %1127 = vmatprep.subr.mxu0 0.0
    %1128 = vmatpush1.msra.mxu0 %v648
    %1129 = vmatprep.subr.mxu0 0.0
    %1130 = vmatpush1.msra.mxu0 %v651
    %1131 = vmatprep.subr.mxu0 0.0
    %1132 = vmatpush1.msra.mxu0 %v654
    %1133 = vmatprep.subr.mxu0 0.0
    %1134 = vmatpush1.msra.mxu0 %v657
    %1135 = vmatprep.subr.mxu0 0.0
    %1136 = vmatpush1.msra.mxu0 %v660
    %1137 = vmatprep.subr.mxu0 0.0
    %1138 = vmatpush1.msra.mxu0 %v663
    %1139 = vmatprep.subr.mxu0 0.0
    %1140 = vmatpush1.msra.mxu0 %v666
    %1141 = vmatprep.subr.mxu0 0.0
    %1142 = vmatpush1.msra.mxu0 %v669
    %1143 = vmatprep.subr.mxu0 0.0
    %1144 = vmatpush1.msra.mxu0 %v672
    %1145 = vmatprep.subr.mxu0 0.0
    %1146 = vmatpush1.msra.mxu0 %v675
    %1147 = vmatprep.subr.mxu0 0.0
    %1148 = vmatpush1.msra.mxu0 %v678
    %1149 = vmatprep.subr.mxu0 0.0
    %1150 = vmatpush1.msra.mxu0 %v681
    %1151 = vmatprep.subr.mxu0 0.0
    %1152 = vmatpush1.msra.mxu0 %v684
    %1153 = vmatprep.subr.mxu0 0.0
    %1154 = vmatpush1.msra.mxu0 %v687
    %1155 = vmatprep.subr.mxu0 0.0
    %1156 = vmatpush1.msra.mxu0 0.0
    %1157 = vmatprep.subr.mxu0 0.0
    %1158 = vmatpush1.msra.mxu0 0.0
    %1159 = vmatprep.subr.mxu0 0.0
    %1160 = vmatpush1.msra.mxu0 0.0
    %1161 = vmatprep.subr.mxu0 0.0
    %1162 = vmatpush1.msra.mxu0 0.0
    %1163 = vmatprep.subr.mxu0 0.0
    %1164 = vmatpush1.msra.mxu0 0.0
    %1165 = vmatprep.subr.mxu0 0.0
    %1166 = vmatpush1.msra.mxu0 0.0
    %1167 = vmatprep.subr.mxu0 0.0
    %1168 = vmatpush1.msra.mxu0 0.0
    %1169 = vmatprep.subr.mxu0 0.0
    %1170 = vmatpush1.msra.mxu0 0.0
    %1171 = vmatprep.subr.mxu0 0.0
    %1172 = vmatpush1.msra.mxu0 0.0
    %1173 = vmatprep.subr.mxu0 0.0
    %1174 = vmatpush1.msra.mxu0 0.0
    %1175 = vmatprep.subr.mxu0 0.0
    %1176 = vmatpush1.msra.mxu0 0.0
    %1177 = vmatprep.subr.mxu0 0.0
    %1178 = vmatpush1.msra.mxu0 0.0
    %1179 = vmatprep.subr.mxu0 0.0
    %1180 = vmatpush1.msra.mxu0 0.0
    %1181 = vmatprep.subr.mxu0 0.0
    %1182 = vmatpush1.msra.mxu0 0.0
    %1183 = vmatprep.subr.mxu0 0.0
    %1184 = vmatpush1.msra.mxu0 0.0
    %1185 = vmatprep.subr.mxu0 0.0
    %1186 = vmatpush1.msra.mxu0 0.0
    %1187 = vmatprep.mubr.f32.mxu0 0.0
    %1188 = vmatmul.mubr.f32.gmra.mrb[0].mxu0 %v1049
    %v1189 = vpop.f32.mrb[0].mxu0
    %v1190 = vadd.f32 0.0, %v1189
    %v1191 = vpop.f32.mrb[0].mxu0
    %1192 = vdwg.mxu0
    %v1195 = vcombine.low %v1119, %v1121
    %v1197 = vunpack.c.l.s4 1966171168
    %v1198 = vunpack.c.0.s8 %v1197
    %v1199 = vlaneseq
    %v1200 = vshrl.u32 %v1199, 7
    %v1201 = vsub.s32 %v1198, %v1200
    %v1202 = vrot.slane %v1195, %v1201
    %v1204 = vunpack.c.l.s4 1966171168
    %v1205 = vunpack.c.0.s8 %v1204
    %v1206 = vlaneseq
    %v1207 = vshrl.u32 %v1206, 7
    %v1208 = vsub.s32 %v1205, %v1207
    %v1209 = vrot.slane %v1202, %v1208
    %v1211 = vadd.f32 %v1051, %v1209
    %v1212 = vxor.u32 %v1211, 2147483648
    %v1213 = vmul.f32 %v1212, 1.442695
    %v1214 = vpow.pop %v1213
    %v1215 = vadd.f32 %v1214, 1.0
    %v1216 = vrcp.pop %v1215
    %v1217 = vmul.f32 1.0, %v1216
    %v1218 = vadd.f32 %v1190, %v688
    %v1219 = vmul.f32 %v1217, %v1218
    %v1221 = vrot.slane %v1051, 2
    %v1223 = vadd.f32 %v1221, %v1219
    %v1224 = vtanh.pop %v1223
    %v1225 = vsub.f32 %v1049, %v1224
    %v1227 = vrot.slane %v1217, 1
    %v1229 = vmul.f32 %v1227, %v1225
    %v1230 = vadd.f32 %v1224, %v1229
    %s1231 = scalar_lea.vmem [#allocation4], 3
    %v1232 = vld [vmem:[%s1231] ss:$8 sm:$0x7]
    %1233 = vmatprep.subr.mxu0 %v641
    %1234 = vmatpush1.msra.mxu0 %v640
    %1235 = vmatprep.subr.mxu0 %v644
    %1236 = vmatpush1.msra.mxu0 %v643
    %1237 = vmatprep.subr.mxu0 %v647
    %1238 = vmatpush1.msra.mxu0 %v646
    %1239 = vmatprep.subr.mxu0 %v650
    %1240 = vmatpush1.msra.mxu0 %v649
    %1241 = vmatprep.subr.mxu0 %v653
    %1242 = vmatpush1.msra.mxu0 %v652
    %1243 = vmatprep.subr.mxu0 %v656
    %1244 = vmatpush1.msra.mxu0 %v655
    %1245 = vmatprep.subr.mxu0 %v659
    %1246 = vmatpush1.msra.mxu0 %v658
    %1247 = vmatprep.subr.mxu0 %v662
    %1248 = vmatpush1.msra.mxu0 %v661
    %1249 = vmatprep.subr.mxu0 %v665
    %1250 = vmatpush1.msra.mxu0 %v664
    %1251 = vmatprep.subr.mxu0 %v668
    %1252 = vmatpush1.msra.mxu0 %v667
    %1253 = vmatprep.subr.mxu0 %v671
    %1254 = vmatpush1.msra.mxu0 %v670
    %1255 = vmatprep.subr.mxu0 %v674
    %1256 = vmatpush1.msra.mxu0 %v673
    %1257 = vmatprep.subr.mxu0 %v677
    %1258 = vmatpush1.msra.mxu0 %v676
    %1259 = vmatprep.subr.mxu0 %v680
    %1260 = vmatpush1.msra.mxu0 %v679
    %1261 = vmatprep.subr.mxu0 %v683
    %1262 = vmatpush1.msra.mxu0 %v682
    %1263 = vmatprep.subr.mxu0 %v686
    %1264 = vmatpush1.msra.mxu0 %v685
    %1265 = vmatprep.subr.mxu0 0.0
    %1266 = vmatpush1.msra.mxu0 0.0
    %1267 = vmatprep.subr.mxu0 0.0
    %1268 = vmatpush1.msra.mxu0 0.0
    %1269 = vmatprep.subr.mxu0 0.0
    %1270 = vmatpush1.msra.mxu0 0.0
    %1271 = vmatprep.subr.mxu0 0.0
    %1272 = vmatpush1.msra.mxu0 0.0
    %1273 = vmatprep.subr.mxu0 0.0
    %1274 = vmatpush1.msra.mxu0 0.0
    %1275 = vmatprep.subr.mxu0 0.0
    %1276 = vmatpush1.msra.mxu0 0.0
    %1277 = vmatprep.subr.mxu0 0.0
    %1278 = vmatpush1.msra.mxu0 0.0
    %1279 = vmatprep.subr.mxu0 0.0
    %1280 = vmatpush1.msra.mxu0 0.0
    %1281 = vmatprep.subr.mxu0 0.0
    %1282 = vmatpush1.msra.mxu0 0.0
    %1283 = vmatprep.subr.mxu0 0.0
    %1284 = vmatpush1.msra.mxu0 0.0
    %1285 = vmatprep.subr.mxu0 0.0
    %1286 = vmatpush1.msra.mxu0 0.0
    %1287 = vmatprep.subr.mxu0 0.0
    %1288 = vmatpush1.msra.mxu0 0.0
    %1289 = vmatprep.subr.mxu0 0.0
    %1290 = vmatpush1.msra.mxu0 0.0
    %1291 = vmatprep.subr.mxu0 0.0
    %1292 = vmatpush1.msra.mxu0 0.0
    %1293 = vmatprep.subr.mxu0 0.0
    %1294 = vmatpush1.msra.mxu0 0.0
    %1295 = vmatprep.subr.mxu0 0.0
    %1296 = vmatpush1.msra.mxu0 0.0
    %1297 = vmatprep.mubr.f32.mxu0 0.0
    %1298 = vmatmul.mubr.f32.gmra.mrb[0].mxu0 %v1230
    %v1299 = vpop.f32.mrb[0].mxu0
    %v1300 = vadd.f32 0.0, %v1299
    %v1301 = vpop.f32.mrb[0].mxu0
    %v1302 = vadd.f32 0.0, %v1301
    %1303 = vdwg.mxu0
    %1304 = vmatprep.subr.mxu0 0.0
    %1305 = vmatpush1.msra.mxu0 %v642
    %1306 = vmatprep.subr.mxu0 0.0
    %1307 = vmatpush1.msra.mxu0 %v645
    %1308 = vmatprep.subr.mxu0 0.0
    %1309 = vmatpush1.msra.mxu0 %v648
    %1310 = vmatprep.subr.mxu0 0.0
    %1311 = vmatpush1.msra.mxu0 %v651
    %1312 = vmatprep.subr.mxu0 0.0
    %1313 = vmatpush1.msra.mxu0 %v654
    %1314 = vmatprep.subr.mxu0 0.0
    %1315 = vmatpush1.msra.mxu0 %v657
    %1316 = vmatprep.subr.mxu0 0.0
    %1317 = vmatpush1.msra.mxu0 %v660
    %1318 = vmatprep.subr.mxu0 0.0
    %1319 = vmatpush1.msra.mxu0 %v663
    %1320 = vmatprep.subr.mxu0 0.0
    %1321 = vmatpush1.msra.mxu0 %v666
    %1322 = vmatprep.subr.mxu0 0.0
    %1323 = vmatpush1.msra.mxu0 %v669
    %1324 = vmatprep.subr.mxu0 0.0
    %1325 = vmatpush1.msra.mxu0 %v672
    %1326 = vmatprep.subr.mxu0 0.0
    %1327 = vmatpush1.msra.mxu0 %v675
    %1328 = vmatprep.subr.mxu0 0.0
    %1329 = vmatpush1.msra.mxu0 %v678
    %1330 = vmatprep.subr.mxu0 0.0
    %1331 = vmatpush1.msra.mxu0 %v681
    %1332 = vmatprep.subr.mxu0 0.0
    %1333 = vmatpush1.msra.mxu0 %v684
    %1334 = vmatprep.subr.mxu0 0.0
    %1335 = vmatpush1.msra.mxu0 %v687
    %1336 = vmatprep.subr.mxu0 0.0
    %1337 = vmatpush1.msra.mxu0 0.0
    %1338 = vmatprep.subr.mxu0 0.0
    %1339 = vmatpush1.msra.mxu0 0.0
    %1340 = vmatprep.subr.mxu0 0.0
    %1341 = vmatpush1.msra.mxu0 0.0
    %1342 = vmatprep.subr.mxu0 0.0
    %1343 = vmatpush1.msra.mxu0 0.0
    %1344 = vmatprep.subr.mxu0 0.0
    %1345 = vmatpush1.msra.mxu0 0.0
    %1346 = vmatprep.subr.mxu0 0.0
    %1347 = vmatpush1.msra.mxu0 0.0
    %1348 = vmatprep.subr.mxu0 0.0
    %1349 = vmatpush1.msra.mxu0 0.0
    %1350 = vmatprep.subr.mxu0 0.0
    %1351 = vmatpush1.msra.mxu0 0.0
    %1352 = vmatprep.subr.mxu0 0.0
    %1353 = vmatpush1.msra.mxu0 0.0
    %1354 = vmatprep.subr.mxu0 0.0
    %1355 = vmatpush1.msra.mxu0 0.0
    %1356 = vmatprep.subr.mxu0 0.0
    %1357 = vmatpush1.msra.mxu0 0.0
    %1358 = vmatprep.subr.mxu0 0.0
    %1359 = vmatpush1.msra.mxu0 0.0
    %1360 = vmatprep.subr.mxu0 0.0
    %1361 = vmatpush1.msra.mxu0 0.0
    %1362 = vmatprep.subr.mxu0 0.0
    %1363 = vmatpush1.msra.mxu0 0.0
    %1364 = vmatprep.subr.mxu0 0.0
    %1365 = vmatpush1.msra.mxu0 0.0
    %1366 = vmatprep.subr.mxu0 0.0
    %1367 = vmatpush1.msra.mxu0 0.0
    %1368 = vmatprep.mubr.f32.mxu0 0.0
    %1369 = vmatmul.mubr.f32.gmra.mrb[0].mxu0 %v1230
    %v1370 = vpop.f32.mrb[0].mxu0
    %v1371 = vadd.f32 0.0, %v1370
    %v1372 = vpop.f32.mrb[0].mxu0
    %1373 = vdwg.mxu0
    %v1376 = vcombine.low %v1300, %v1302
    %v1378 = vunpack.c.l.s4 1966171168
    %v1379 = vunpack.c.0.s8 %v1378
    %v1380 = vlaneseq
    %v1381 = vshrl.u32 %v1380, 7
    %v1382 = vsub.s32 %v1379, %v1381
    %v1383 = vrot.slane %v1376, %v1382
    %v1385 = vunpack.c.l.s4 1966171168
    %v1386 = vunpack.c.0.s8 %v1385
    %v1387 = vlaneseq
    %v1388 = vshrl.u32 %v1387, 7
    %v1389 = vsub.s32 %v1386, %v1388
    %v1390 = vrot.slane %v1383, %v1389
    %v1392 = vadd.f32 %v1232, %v1390
    %v1393 = vxor.u32 %v1392, 2147483648
    %v1394 = vmul.f32 %v1393, 1.442695
    %v1395 = vpow.pop %v1394
    %v1396 = vadd.f32 %v1395, 1.0
    %v1397 = vrcp.pop %v1396
    %v1398 = vmul.f32 1.0, %v1397
    %v1399 = vadd.f32 %v1371, %v688
    %v1400 = vmul.f32 %v1398, %v1399
    %v1402 = vrot.slane %v1232, 2
    %v1404 = vadd.f32 %v1402, %v1400
    %v1405 = vtanh.pop %v1404
    %v1406 = vsub.f32 %v1230, %v1405
    %v1408 = vrot.slane %v1398, 1
    %v1410 = vmul.f32 %v1408, %v1406
    %v1411 = vadd.f32 %v1405, %v1410
    %s1412 = scalar_lea.vmem [#allocation4], 4
    %v1413 = vld [vmem:[%s1412] ss:$8 sm:$0x7]
    %1414 = vmatprep.subr.mxu0 %v641
    %1415 = vmatpush1.msra.mxu0 %v640
    %1416 = vmatprep.subr.mxu0 %v644
    %1417 = vmatpush1.msra.mxu0 %v643
    %1418 = vmatprep.subr.mxu0 %v647
    %1419 = vmatpush1.msra.mxu0 %v646
    %1420 = vmatprep.subr.mxu0 %v650
    %1421 = vmatpush1.msra.mxu0 %v649
    %1422 = vmatprep.subr.mxu0 %v653
    %1423 = vmatpush1.msra.mxu0 %v652
    %1424 = vmatprep.subr.mxu0 %v656
    %1425 = vmatpush1.msra.mxu0 %v655
    %1426 = vmatprep.subr.mxu0 %v659
    %1427 = vmatpush1.msra.mxu0 %v658
    %1428 = vmatprep.subr.mxu0 %v662
    %1429 = vmatpush1.msra.mxu0 %v661
    %1430 = vmatprep.subr.mxu0 %v665
    %1431 = vmatpush1.msra.mxu0 %v664
    %1432 = vmatprep.subr.mxu0 %v668
    %1433 = vmatpush1.msra.mxu0 %v667
    %1434 = vmatprep.subr.mxu0 %v671
    %1435 = vmatpush1.msra.mxu0 %v670
    %1436 = vmatprep.subr.mxu0 %v674
    %1437 = vmatpush1.msra.mxu0 %v673
    %1438 = vmatprep.subr.mxu0 %v677
    %1439 = vmatpush1.msra.mxu0 %v676
    %1440 = vmatprep.subr.mxu0 %v680
    %1441 = vmatpush1.msra.mxu0 %v679
    %1442 = vmatprep.subr.mxu0 %v683
    %1443 = vmatpush1.msra.mxu0 %v682
    %1444 = vmatprep.subr.mxu0 %v686
    %1445 = vmatpush1.msra.mxu0 %v685
    %1446 = vmatprep.subr.mxu0 0.0
    %1447 = vmatpush1.msra.mxu0 0.0
    %1448 = vmatprep.subr.mxu0 0.0
    %1449 = vmatpush1.msra.mxu0 0.0
    %1450 = vmatprep.subr.mxu0 0.0
    %1451 = vmatpush1.msra.mxu0 0.0
    %1452 = vmatprep.subr.mxu0 0.0
    %1453 = vmatpush1.msra.mxu0 0.0
    %1454 = vmatprep.subr.mxu0 0.0
    %1455 = vmatpush1.msra.mxu0 0.0
    %1456 = vmatprep.subr.mxu0 0.0
    %1457 = vmatpush1.msra.mxu0 0.0
    %1458 = vmatprep.subr.mxu0 0.0
    %1459 = vmatpush1.msra.mxu0 0.0
    %1460 = vmatprep.subr.mxu0 0.0
    %1461 = vmatpush1.msra.mxu0 0.0
    %1462 = vmatprep.subr.mxu0 0.0
    %1463 = vmatpush1.msra.mxu0 0.0
    %1464 = vmatprep.subr.mxu0 0.0
    %1465 = vmatpush1.msra.mxu0 0.0
    %1466 = vmatprep.subr.mxu0 0.0
    %1467 = vmatpush1.msra.mxu0 0.0
    %1468 = vmatprep.subr.mxu0 0.0
    %1469 = vmatpush1.msra.mxu0 0.0
    %1470 = vmatprep.subr.mxu0 0.0
    %1471 = vmatpush1.msra.mxu0 0.0
    %1472 = vmatprep.subr.mxu0 0.0
    %1473 = vmatpush1.msra.mxu0 0.0
    %1474 = vmatprep.subr.mxu0 0.0
    %1475 = vmatpush1.msra.mxu0 0.0
    %1476 = vmatprep.subr.mxu0 0.0
    %1477 = vmatpush1.msra.mxu0 0.0
    %1478 = vmatprep.mubr.f32.mxu0 0.0
    %1479 = vmatmul.mubr.f32.gmra.mrb[0].mxu0 %v1411
    %v1480 = vpop.f32.mrb[0].mxu0
    %v1481 = vadd.f32 0.0, %v1480
    %v1482 = vpop.f32.mrb[0].mxu0
    %v1483 = vadd.f32 0.0, %v1482
    %1484 = vdwg.mxu0
    %1485 = vmatprep.subr.mxu0 0.0
    %1486 = vmatpush1.msra.mxu0 %v642
    %1487 = vmatprep.subr.mxu0 0.0
    %1488 = vmatpush1.msra.mxu0 %v645
    %1489 = vmatprep.subr.mxu0 0.0
    %1490 = vmatpush1.msra.mxu0 %v648
    %1491 = vmatprep.subr.mxu0 0.0
    %1492 = vmatpush1.msra.mxu0 %v651
    %1493 = vmatprep.subr.mxu0 0.0
    %1494 = vmatpush1.msra.mxu0 %v654
    %1495 = vmatprep.subr.mxu0 0.0
    %1496 = vmatpush1.msra.mxu0 %v657
    %1497 = vmatprep.subr.mxu0 0.0
    %1498 = vmatpush1.msra.mxu0 %v660
    %1499 = vmatprep.subr.mxu0 0.0
    %1500 = vmatpush1.msra.mxu0 %v663
    %1501 = vmatprep.subr.mxu0 0.0
    %1502 = vmatpush1.msra.mxu0 %v666
    %1503 = vmatprep.subr.mxu0 0.0
    %1504 = vmatpush1.msra.mxu0 %v669
    %1505 = vmatprep.subr.mxu0 0.0
    %1506 = vmatpush1.msra.mxu0 %v672
    %1507 = vmatprep.subr.mxu0 0.0
    %1508 = vmatpush1.msra.mxu0 %v675
    %1509 = vmatprep.subr.mxu0 0.0
    %1510 = vmatpush1.msra.mxu0 %v678
    %1511 = vmatprep.subr.mxu0 0.0
    %1512 = vmatpush1.msra.mxu0 %v681
    %1513 = vmatprep.subr.mxu0 0.0
    %1514 = vmatpush1.msra.mxu0 %v684
    %1515 = vmatprep.subr.mxu0 0.0
    %1516 = vmatpush1.msra.mxu0 %v687
    %1517 = vmatprep.subr.mxu0 0.0
    %1518 = vmatpush1.msra.mxu0 0.0
    %1519 = vmatprep.subr.mxu0 0.0
    %1520 = vmatpush1.msra.mxu0 0.0
    %1521 = vmatprep.subr.mxu0 0.0
    %1522 = vmatpush1.msra.mxu0 0.0
    %1523 = vmatprep.subr.mxu0 0.0
    %1524 = vmatpush1.msra.mxu0 0.0
    %1525 = vmatprep.subr.mxu0 0.0
    %1526 = vmatpush1.msra.mxu0 0.0
    %1527 = vmatprep.subr.mxu0 0.0
    %1528 = vmatpush1.msra.mxu0 0.0
    %1529 = vmatprep.subr.mxu0 0.0
    %1530 = vmatpush1.msra.mxu0 0.0
    %1531 = vmatprep.subr.mxu0 0.0
    %1532 = vmatpush1.msra.mxu0 0.0
    %1533 = vmatprep.subr.mxu0 0.0
    %1534 = vmatpush1.msra.mxu0 0.0
    %1535 = vmatprep.subr.mxu0 0.0
    %1536 = vmatpush1.msra.mxu0 0.0
    %1537 = vmatprep.subr.mxu0 0.0
    %1538 = vmatpush1.msra.mxu0 0.0
    %1539 = vmatprep.subr.mxu0 0.0
    %1540 = vmatpush1.msra.mxu0 0.0
    %1541 = vmatprep.subr.mxu0 0.0
    %1542 = vmatpush1.msra.mxu0 0.0
    %1543 = vmatprep.subr.mxu0 0.0
    %1544 = vmatpush1.msra.mxu0 0.0
    %1545 = vmatprep.subr.mxu0 0.0
    %1546 = vmatpush1.msra.mxu0 0.0
    %1547 = vmatprep.subr.mxu0 0.0
    %1548 = vmatpush1.msra.mxu0 0.0
    %1549 = vmatprep.mubr.f32.mxu0 0.0
    %1550 = vmatmul.mubr.f32.gmra.mrb[0].mxu0 %v1411
    %v1551 = vpop.f32.mrb[0].mxu0
    %v1552 = vadd.f32 0.0, %v1551
    %v1553 = vpop.f32.mrb[0].mxu0
    %1554 = vdwg.mxu0
    %v1557 = vcombine.low %v1481, %v1483
    %v1559 = vunpack.c.l.s4 1966171168
    %v1560 = vunpack.c.0.s8 %v1559
    %v1561 = vlaneseq
    %v1562 = vshrl.u32 %v1561, 7
    %v1563 = vsub.s32 %v1560, %v1562
    %v1564 = vrot.slane %v1557, %v1563
    %v1566 = vunpack.c.l.s4 1966171168
    %v1567 = vunpack.c.0.s8 %v1566
    %v1568 = vlaneseq
    %v1569 = vshrl.u32 %v1568, 7
    %v1570 = vsub.s32 %v1567, %v1569
    %v1571 = vrot.slane %v1564, %v1570
    %v1573 = vadd.f32 %v1413, %v1571
    %v1574 = vxor.u32 %v1573, 2147483648
    %v1575 = vmul.f32 %v1574, 1.442695
    %v1576 = vpow.pop %v1575
    %v1577 = vadd.f32 %v1576, 1.0
    %v1578 = vrcp.pop %v1577
    %v1579 = vmul.f32 1.0, %v1578
    %v1580 = vadd.f32 %v1552, %v688
    %v1581 = vmul.f32 %v1579, %v1580
    %v1583 = vrot.slane %v1413, 2
    %v1585 = vadd.f32 %v1583, %v1581
    %v1586 = vtanh.pop %v1585
    %v1587 = vsub.f32 %v1411, %v1586
    %v1589 = vrot.slane %v1579, 1
    %v1591 = vmul.f32 %v1589, %v1587
    %v1592 = vadd.f32 %v1586, %v1591
    %v1593 = vmax.f32 %v1592, 0.0
    %v1594 = vld [vmem:[%s9] sm:$0xff]
    %v1595 = vld [vmem:[%s9 + $0x8] sm:$0xff]
    %v1596 = vld [vmem:[%s9 + $0x10] sm:$0xff]
    %v1597 = vld [vmem:[%s9 + $0x18] sm:$0xff]
    %v1598 = vld [vmem:[%s9 + $0x20] sm:$0xff]
    %v1599 = vld [vmem:[%s9 + $0x28] sm:$0xff]
    %v1600 = vld [vmem:[%s9 + $0x30] sm:$0xff]
    %v1601 = vld [vmem:[%s9 + $0x38] sm:$0xff]
    %v1602 = vld [vmem:[%s9 + $0x40] sm:$0xff]
    %v1603 = vld [vmem:[%s9 + $0x48] sm:$0xff]
    %v1604 = vld [vmem:[%s9 + $0x50] sm:$0xff]
    %v1605 = vld [vmem:[%s9 + $0x58] sm:$0xff]
    %v1606 = vld [vmem:[%s9 + $0x60] sm:$0xff]
    %v1607 = vld [vmem:[%s9 + $0x68] sm:$0xff]
    %v1608 = vld [vmem:[%s9 + $0x70] sm:$0xff]
    %v1609 = vld [vmem:[%s9 + $0x78] sm:$0xff]
    %v1610 = vld [vmem:[%s10] sm:$0x1]
    %1611 = vmatprep.subr.mxu0 0.0
    %1612 = vmatpush1.msra.mxu0 %v1594
    %1613 = vmatprep.subr.mxu0 0.0
    %1614 = vmatpush1.msra.mxu0 %v1595
    %1615 = vmatprep.subr.mxu0 0.0
    %1616 = vmatpush1.msra.mxu0 %v1596
    %1617 = vmatprep.subr.mxu0 0.0
    %1618 = vmatpush1.msra.mxu0 %v1597
    %1619 = vmatprep.subr.mxu0 0.0
    %1620 = vmatpush1.msra.mxu0 %v1598
    %1621 = vmatprep.subr.mxu0 0.0
    %1622 = vmatpush1.msra.mxu0 %v1599
    %1623 = vmatprep.subr.mxu0 0.0
    %1624 = vmatpush1.msra.mxu0 %v1600
    %1625 = vmatprep.subr.mxu0 0.0
    %1626 = vmatpush1.msra.mxu0 %v1601
    %1627 = vmatprep.subr.mxu0 0.0
    %1628 = vmatpush1.msra.mxu0 %v1602
    %1629 = vmatprep.subr.mxu0 0.0
    %1630 = vmatpush1.msra.mxu0 %v1603
    %1631 = vmatprep.subr.mxu0 0.0
    %1632 = vmatpush1.msra.mxu0 %v1604
    %1633 = vmatprep.subr.mxu0 0.0
    %1634 = vmatpush1.msra.mxu0 %v1605
    %1635 = vmatprep.subr.mxu0 0.0
    %1636 = vmatpush1.msra.mxu0 %v1606
    %1637 = vmatprep.subr.mxu0 0.0
    %1638 = vmatpush1.msra.mxu0 %v1607
    %1639 = vmatprep.subr.mxu0 0.0
    %1640 = vmatpush1.msra.mxu0 %v1608
    %1641 = vmatprep.subr.mxu0 0.0
    %1642 = vmatpush1.msra.mxu0 %v1609
    %1643 = vmatprep.subr.mxu0 0.0
    %1644 = vmatpush1.msra.mxu0 0.0
    %1645 = vmatprep.subr.mxu0 0.0
    %1646 = vmatpush1.msra.mxu0 0.0
    %1647 = vmatprep.subr.mxu0 0.0
    %1648 = vmatpush1.msra.mxu0 0.0
    %1649 = vmatprep.subr.mxu0 0.0
    %1650 = vmatpush1.msra.mxu0 0.0
    %1651 = vmatprep.subr.mxu0 0.0
    %1652 = vmatpush1.msra.mxu0 0.0
    %1653 = vmatprep.subr.mxu0 0.0
    %1654 = vmatpush1.msra.mxu0 0.0
    %1655 = vmatprep.subr.mxu0 0.0
    %1656 = vmatpush1.msra.mxu0 0.0
    %1657 = vmatprep.subr.mxu0 0.0
    %1658 = vmatpush1.msra.mxu0 0.0
    %1659 = vmatprep.subr.mxu0 0.0
    %1660 = vmatpush1.msra.mxu0 0.0
    %1661 = vmatprep.subr.mxu0 0.0
    %1662 = vmatpush1.msra.mxu0 0.0
    %1663 = vmatprep.subr.mxu0 0.0
    %1664 = vmatpush1.msra.mxu0 0.0
    %1665 = vmatprep.subr.mxu0 0.0
    %1666 = vmatpush1.msra.mxu0 0.0
    %1667 = vmatprep.subr.mxu0 0.0
    %1668 = vmatpush1.msra.mxu0 0.0
    %1669 = vmatprep.subr.mxu0 0.0
    %1670 = vmatpush1.msra.mxu0 0.0
    %1671 = vmatprep.subr.mxu0 0.0
    %1672 = vmatpush1.msra.mxu0 0.0
    %1673 = vmatprep.subr.mxu0 0.0
    %1674 = vmatpush1.msra.mxu0 0.0
    %1675 = vmatprep.mubr.f32.mxu0 0.0
    %1676 = vmatmul.mubr.f32.gmra.mrb[0].mxu0 %v1593
    %v1677 = vpop.f32.mrb[0].mxu0
    %v1678 = vadd.f32 %v1610, %v1677
    %v1679 = vpop.f32.mrb[0].mxu0
    %1680 = vdwg.mxu0
    %1681 = vst.msk [vmem:[#allocation15] sm:$0x1] %vm124, %v1678
    // Predicated region
    $region66: #{tpu_custom_call.1} parent=1 // pred_check
      _
    $region67: #{tpu_custom_call.1} parent=1 // pred_check_branch
      %1683 = sbr.rel (0) target = $region69
    $region68: #{tpu_custom_call.1} parent=1 // pred_region
      %s1685 = ssub.s32 16, 16
      %1686 = vsyncadd [#allocation7], %s1685
      %s1688 = sshll.u32 [#allocation15], 4
      %s1689 = int_to_ptr.vmem [resolvable:$true] %s1688
      %1691 = dma.vmem_to_hbm [thread:$0]  %s1689, 16, %s11, [#allocation7]
    $region69: #{tpu_custom_call.1} parent=1 // pred_fallthru
      _
    // Predicated region
    $region70: #{tpu_custom_call.1} parent=1 // pred_check
      _
    $region71: #{tpu_custom_call.1} parent=1 // pred_check_branch
      %1693 = sbr.rel (0) target = $region73
    $region72: #{tpu_custom_call.1} parent=1 // pred_region
      %1694 = dma.done [#allocation7], 16
    $region73: #{tpu_custom_call.1} parent=1 // pred_fallthru
      _
    %1695 = vsyncpa [#allocation6], 1
    %1696 = vsyncpa [#allocation13], 1
    %1697 = vsyncpa [#allocation7], 1
    %1698 = vsyncpa [#allocation8], 1
    %1699 = vsyncpa [#allocation9], 1

</llo_original>
